<compile_context>
chip_gen: v6e
topology: v6e:2x2x1
jax: 0.10.0
libtpu: 0.0.40
codegen_flags: <defaults>
</compile_context>

<pallas_src>
import jax
import jax.numpy as jnp
from jax.experimental import pallas as pl
from jax.experimental.pallas import tpu as pltpu

EPS = 1e-5
LANE = 128


# ----------------------------------------------------------------------------
# Pass 1: y = (A_hat @ x) @ W^T + b, plus per-row-tile BN partial statistics.
# ----------------------------------------------------------------------------
def _gcn_conv_kernel(a_ref, x_ref, wt_ref, b_ref,
                     y_ref, psum_ref, psq_ref, acc_ref):
    k = pl.program_id(1)

    @pl.when(k == 0)
    def _():
        acc_ref[...] = jnp.zeros_like(acc_ref)

    # [tm, tk](bf16) @ [tk, f_in](bf16) -> f32 accumulation on the MXU.
    acc_ref[...] += jnp.dot(a_ref[...], x_ref[...],
                            preferred_element_type=jnp.float32)

    @pl.when(k == pl.num_programs(1) - 1)
    def _():
        # Cheap epilogue matmul on the narrow feature dim + conv bias.
        y = jnp.dot(acc_ref[...], wt_ref[...],
                    preferred_element_type=jnp.float32) + b_ref[...]
        y_ref[...] = y
        f_pad = y.shape[-1]
        # Partial BatchNorm statistics for this row tile (finished outside,
        # so the full [N, F] activation never has to be resident at once).
        psum_ref[...] = jnp.sum(y, axis=0).reshape(1, 1, f_pad)
        psq_ref[...] = jnp.sum(y * y, axis=0).reshape(1, 1, f_pad)


# ----------------------------------------------------------------------------
# Pass 2: apply BatchNorm affine normalization per row tile.
# ----------------------------------------------------------------------------
def _bn_apply_kernel(y_ref, mean_ref, var_ref, g_ref, b_ref, o_ref):
    inv = jax.lax.rsqrt(var_ref[...] + EPS)
    o_ref[...] = ((y_ref[...] - mean_ref[...]) * inv * g_ref[...]
                  + b_ref[...]).astype(o_ref.dtype)


def gcn_normalize_dense(edge_index, edge_weight, num_nodes):
    """Dense symmetrically-normalized adjacency with self-loops (PyG gcn_norm).

    A_hat[dst, src] = deg[src]^-1/2 * w_e * deg[dst]^-1/2, so out = A_hat @ h.
    """
    # TODO(synk): scatter-add graph preprocessing stays in plain JAX; a sparse
    # CSR gather kernel (PrefetchScalarGridSpec) would avoid the dense N^2 A_hat.
    row, col = edge_index[0], edge_index[1]
    loop = jnp.arange(num_nodes, dtype=edge_index.dtype)
    row = jnp.concatenate([row, loop])
    col = jnp.concatenate([col, loop])
    w = jnp.concatenate(
        [edge_weight, jnp.ones((num_nodes,), edge_weight.dtype)])
    deg = jnp.zeros((num_nodes,), edge_weight.dtype).at[col].add(w)
    dinv = jnp.where(deg > 0, jax.lax.rsqrt(deg), 0.0)
    norm = dinv[row] * w * dinv[col]
    a = jnp.zeros((num_nodes, num_nodes), edge_weight.dtype)
    a = a.at[col, row].add(norm)
    return a


def _pick_tile(n, cap, align):
    """Largest multiple of `align` that divides n and is <= cap; else the full dim."""
    if n <= cap:
        return n
    t = (cap // align) * align
    while t >= align:
        if n % t == 0:
            return t
        t -= align
    return n  # full-extent block is always legal


def conv_norm_block(x, edge_index, edge_weight, w, b, gamma, beta,
                    *, tm_cap=256, tk_cap=2048,
                    vmem_limit_bytes=64 * 1024 * 1024):
    n, f_in = x.shape
    f_out = w.shape[0]
    f_pad = pl.cdiv(f_out, LANE) * LANE  # lane-dense epilogue / stores

    # HBM-dominant operand in bf16 (f32 accumulation keeps matmul error small).
    a_hat = gcn_normalize_dense(edge_index, edge_weight, n).astype(jnp.bfloat16)
    x_bf = x.astype(jnp.bfloat16)

    # Lane-padded parameter slabs; padded columns produce exact zeros and are
    # sliced away at the end.
    wt = jnp.zeros((f_in, f_pad), jnp.float32).at[:, :f_out].set(
        w.T.astype(jnp.float32))
    b2 = jnp.zeros((1, f_pad), jnp.float32).at[:, :f_out].set(
        b.astype(jnp.float32))
    g2 = jnp.zeros((1, f_pad), jnp.float32).at[:, :f_out].set(
        gamma.astype(jnp.float32))
    be2 = jnp.zeros((1, f_pad), jnp.float32).at[:, :f_out].set(
        beta.astype(jnp.float32))

    tm = _pick_tile(n, tm_cap, 8)     # row tile (v7x-safe; raise for v6e)
    tk = _pick_tile(n, tk_cap, LANE)  # contraction tile
    gm, gk = n // tm, n // tk

    y, psum, psq = pl.pallas_call(
        _gcn_conv_kernel,
        out_shape=(
            jax.ShapeDtypeStruct((n, f_pad), jnp.float32),
            jax.ShapeDtypeStruct((gm, 1, f_pad), jnp.float32),
            jax.ShapeDtypeStruct((gm, 1, f_pad), jnp.float32),
        ),
        grid_spec=pltpu.PrefetchScalarGridSpec(
            num_scalar_prefetch=0,
            grid=(gm, gk),
            in_specs=[
                pl.BlockSpec((tm, tk), lambda i, k: (i, k)),       # A_hat tile
                pl.BlockSpec((tk, f_in), lambda i, k: (k, 0)),     # x tile
                pl.BlockSpec((f_in, f_pad), lambda i, k: (0, 0)),  # W^T (padded)
                pl.BlockSpec((1, f_pad), lambda i, k: (0, 0)),     # conv bias
            ],
            out_specs=[
                pl.BlockSpec((tm, f_pad), lambda i, k: (i, 0)),       # y
                pl.BlockSpec((1, 1, f_pad), lambda i, k: (i, 0, 0)),  # sum part.
                pl.BlockSpec((1, 1, f_pad), lambda i, k: (i, 0, 0)),  # sq part.
            ],
            scratch_shapes=[pltpu.VMEM((tm, f_in), jnp.float32)],
        ),
        compiler_params=pltpu.CompilerParams(
            dimension_semantics=("parallel", "arbitrary"),
            vmem_limit_bytes=vmem_limit_bytes),
    )(a_hat, x_bf, wt, b2)

    # Finish BatchNorm batch statistics (tiny O(F) work).
    # TODO(synk): running_mean/running_var buffer updates of nn.BatchNorm are
    # module state and are not produced here (pure forward activation only).
    total = jnp.sum(psum, axis=(0, 1))
    total_sq = jnp.sum(psq, axis=(0, 1))
    mean = total / n
    var = jnp.maximum(total_sq / n - mean * mean, 0.0)  # biased (training mode)
    mean2 = mean.reshape(1, f_pad)
    var2 = var.reshape(1, f_pad)

    out = pl.pallas_call(
        _bn_apply_kernel,
        out_shape=jax.ShapeDtypeStruct((n, f_pad), x.dtype),
        grid_spec=pltpu.PrefetchScalarGridSpec(
            num_scalar_prefetch=0,
            grid=(gm,),
            in_specs=[
                pl.BlockSpec((tm, f_pad), lambda i: (i, 0)),
                pl.BlockSpec((1, f_pad), lambda i: (0, 0)),
                pl.BlockSpec((1, f_pad), lambda i: (0, 0)),
                pl.BlockSpec((1, f_pad), lambda i: (0, 0)),
                pl.BlockSpec((1, f_pad), lambda i: (0, 0)),
            ],
            out_specs=pl.BlockSpec((tm, f_pad), lambda i: (i, 0)),
        ),
        compiler_params=pltpu.CompilerParams(
            dimension_semantics=("parallel",),
            vmem_limit_bytes=vmem_limit_bytes),
    )(y, mean2, var2, g2, be2)

    return out[:, :f_out]


if __name__ == "__main__":
    key = jax.random.PRNGKey(0)
    N, F_IN, MULT, E = 512, 4, 2, 2048   # small, but exercises row tiling
    F_OUT = MULT * F_IN

    k1, k2, k3, k4 = jax.random.split(key, 4)
    x = jax.random.normal(k1, (N, F_IN), jnp.float32)
    edge_index = jax.random.randint(k2, (2, E), 0, N, dtype=jnp.int32)
    edge_weight = jax.random.uniform(k3, (E,), jnp.float32, 0.5, 1.5)

    # GCNConv params: glorot weight [F_OUT, F_IN], zero bias (PyG defaults).
    limit = (6.0 / (F_IN + F_OUT)) ** 0.5
    w = jax.random.uniform(k4, (F_OUT, F_IN), jnp.float32, -limit, limit)
    b = jnp.zeros((F_OUT,), jnp.float32)
    # BatchNorm params: gamma=1, beta=0 (default affine init).
    gamma = jnp.ones((F_OUT,), jnp.float32)
    beta = jnp.zeros((F_OUT,), jnp.float32)

    out = conv_norm_block(x, edge_index, edge_weight, w, b, gamma, beta)
    jax.block_until_ready(out)
    assert out.shape == (N, F_OUT) and out.dtype == jnp.float32
    assert bool(jnp.all(jnp.isfinite(out)))

    # Reference with the same bf16-quantized operands (checks the kernel math;
    # f32 accumulation makes reassociation error tiny).
    a_q = gcn_normalize_dense(edge_index, edge_weight, N).astype(
        jnp.bfloat16).astype(jnp.float32)
    x_q = x.astype(jnp.bfloat16).astype(jnp.float32)
    y_r = (a_q @ x_q) @ w.T.astype(jnp.float32) + b
    mu = y_r.mean(0)
    va = y_r.var(0)
    ref = (y_r - mu) * jax.lax.rsqrt(va + EPS) * gamma + beta
    err = float(jnp.max(jnp.abs(out - ref)))
    assert err < 1e-2, f"max abs err {err}"
    print("KERNEL_OK")
</pallas_src>

<mosaic_0001>
module attributes {stable_mosaic.version = 11 : i64} {
  func.func @_gcn_conv_kernel(%arg0: i32, %arg1: i32, %arg2: memref<256x512xbf16, #tpu.memory_space<vmem>>, %arg3: memref<512x4xbf16, #tpu.memory_space<vmem>>, %arg4: memref<4x128xf32, #tpu.memory_space<vmem>>, %arg5: memref<1x128xf32, #tpu.memory_space<vmem>>, %arg6: memref<256x128xf32, #tpu.memory_space<vmem>>, %arg7: memref<1x1x128xf32, #tpu.memory_space<vmem>>, %arg8: memref<1x1x128xf32, #tpu.memory_space<vmem>>, %arg9: memref<256x4xf32, #tpu.memory_space<vmem>>) attributes {dimension_semantics = [#tpu.dimension_semantics<parallel>, #tpu.dimension_semantics<arbitrary>], iteration_bounds = array<i64: 2, 1>, scalar_prefetch = 0 : i64, scratch_operands = 1 : i64, tpu.core_type = #tpu.core_type<tc>, window_params = [{transform_indices = @transform_0, window_bounds = array<i64: 256, 512>}, {transform_indices = @transform_1, window_bounds = array<i64: 512, 4>}, {pipeline_mode = #tpu.pipeline_mode<synchronous>, transform_indices = @transform_2, window_bounds = array<i64: 4, 128>}, {pipeline_mode = #tpu.pipeline_mode<synchronous>, transform_indices = @transform_3, window_bounds = array<i64: 1, 128>}, {transform_indices = @transform_4, window_bounds = array<i64: 256, 128>}, {transform_indices = @transform_5, window_bounds = array<i64: 1, 1, 128>}, {transform_indices = @transform_6, window_bounds = array<i64: 1, 1, 128>}]} {
    %c0_i32 = arith.constant 0 : i32
    %0 = arith.cmpi eq, %arg1, %c0_i32 : i32
    %1 = arith.extui %0 : i1 to i32
    %c0_i32_0 = arith.constant 0 : i32
    %2 = arith.cmpi ne, %1, %c0_i32_0 : i32
    scf.if %2 {
      %cst_10 = arith.constant 0.000000e+00 : f32
      %12 = vector.broadcast %cst_10 : f32 to vector<256x4xf32>
      %c0_11 = arith.constant 0 : index
      %c0_12 = arith.constant 0 : index
      %13 = vector.load %arg9[%c0_11, %c0_12] : memref<256x4xf32, #tpu.memory_space<vmem>>, vector<256x4xf32>
      tpu.vector_store %arg9[%c0_11, %c0_12], %12 {strides = array<i32>} : memref<256x4xf32, #tpu.memory_space<vmem>>, vector<256x4xf32>,
    } else {
    }
    %c0 = arith.constant 0 : index
    %c0_1 = arith.constant 0 : index
    %3 = vector.load %arg9[%c0, %c0_1] : memref<256x4xf32, #tpu.memory_space<vmem>>, vector<256x4xf32>
    %c0_2 = arith.constant 0 : index
    %c0_3 = arith.constant 0 : index
    %4 = vector.load %arg2[%c0_2, %c0_3] : memref<256x512xbf16, #tpu.memory_space<vmem>>, vector<256x512xbf16>
    %c0_4 = arith.constant 0 : index
    %c0_5 = arith.constant 0 : index
    %5 = vector.load %arg3[%c0_4, %c0_5] : memref<512x4xbf16, #tpu.memory_space<vmem>>, vector<512x4xbf16>
    %cst = arith.constant dense<0.000000e+00> : vector<256x4xf32>
    %6 = tpu.matmul %4, %5, %cst {dimension_numbers = #tpu.dot_dimension_numbers<[1], [0], [0], [1], [0, 0, 1, 1], [], []>} : vector<256x512xbf16>, vector<512x4xbf16>, vector<256x4xf32> -> vector<256x4xf32>
    %7 = arith.addf %3, %6 : vector<256x4xf32>
    %c0_6 = arith.constant 0 : index
    %c0_7 = arith.constant 0 : index
    %8 = vector.load %arg9[%c0_6, %c0_7] : memref<256x4xf32, #tpu.memory_space<vmem>>, vector<256x4xf32>
    tpu.vector_store %arg9[%c0_6, %c0_7], %7 {strides = array<i32>} : memref<256x4xf32, #tpu.memory_space<vmem>>, vector<256x4xf32>,
    %c0_i32_8 = arith.constant 0 : i32
    %9 = arith.cmpi eq, %arg1, %c0_i32_8 : i32
    %10 = arith.extui %9 : i1 to i32
    %c0_i32_9 = arith.constant 0 : i32
    %11 = arith.cmpi ne, %10, %c0_i32_9 : i32
    scf.if %11 {
      %c0_10 = arith.constant 0 : index
      %c0_11 = arith.constant 0 : index
      %12 = vector.load %arg9[%c0_10, %c0_11] : memref<256x4xf32, #tpu.memory_space<vmem>>, vector<256x4xf32>
      %c0_12 = arith.constant 0 : index
      %c0_13 = arith.constant 0 : index
      %13 = vector.load %arg4[%c0_12, %c0_13] : memref<4x128xf32, #tpu.memory_space<vmem>>, vector<4x128xf32>
      %cst_14 = arith.constant dense<0.000000e+00> : vector<256x128xf32>
      %14 = tpu.matmul %12, %13, %cst_14 {dimension_numbers = #tpu.dot_dimension_numbers<[1], [0], [0], [1], [0, 0, 1, 1], [], []>} : vector<256x4xf32>, vector<4x128xf32>, vector<256x128xf32> -> vector<256x128xf32>
      %c0_15 = arith.constant 0 : index
      %c0_16 = arith.constant 0 : index
      %15 = vector.load %arg5[%c0_15, %c0_16] : memref<1x128xf32, #tpu.memory_space<vmem>>, vector<1x128xf32>
      %16 = vector.broadcast %15 : vector<1x128xf32> to vector<256x128xf32>
      %17 = arith.addf %14, %16 : vector<256x128xf32>
      %c0_17 = arith.constant 0 : index
      %c0_18 = arith.constant 0 : index
      %18 = vector.load %arg6[%c0_17, %c0_18] : memref<256x128xf32, #tpu.memory_space<vmem>>, vector<256x128xf32>
      tpu.vector_store %arg6[%c0_17, %c0_18], %17 {strides = array<i32>} : memref<256x128xf32, #tpu.memory_space<vmem>>, vector<256x128xf32>,
      %cst_19 = arith.constant dense<0.000000e+00> : vector<128xf32>
      %19 = vector.multi_reduction <add>, %17, %cst_19 [0] : vector<256x128xf32> to vector<128xf32>
      %20 = vector.shape_cast %19 : vector<128xf32> to vector<1x1x128xf32>
      %c0_20 = arith.constant 0 : index
      %c0_21 = arith.constant 0 : index
      %c0_22 = arith.constant 0 : index
      %21 = vector.load %arg7[%c0_20, %c0_21, %c0_22] : memref<1x1x128xf32, #tpu.memory_space<vmem>>, vector<1x1x128xf32>
      tpu.vector_store %arg7[%c0_20, %c0_21, %c0_22], %20 {strides = array<i32>} : memref<1x1x128xf32, #tpu.memory_space<vmem>>, vector<1x1x128xf32>,
      %22 = arith.mulf %17, %17 : vector<256x128xf32>
      %cst_23 = arith.constant dense<0.000000e+00> : vector<128xf32>
      %23 = vector.multi_reduction <add>, %22, %cst_23 [0] : vector<256x128xf32> to vector<128xf32>
      %24 = vector.shape_cast %23 : vector<128xf32> to vector<1x1x128xf32>
      %c0_24 = arith.constant 0 : index
      %c0_25 = arith.constant 0 : index
      %c0_26 = arith.constant 0 : index
      %25 = vector.load %arg8[%c0_24, %c0_25, %c0_26] : memref<1x1x128xf32, #tpu.memory_space<vmem>>, vector<1x1x128xf32>
      tpu.vector_store %arg8[%c0_24, %c0_25, %c0_26], %24 {strides = array<i32>} : memref<1x1x128xf32, #tpu.memory_space<vmem>>, vector<1x1x128xf32>,
    } else {
    }
    return
  }
  func.func @transform_0(%arg0: i32, %arg1: i32) -> (i32, i32) {
    %c0_i32 = arith.constant 0 : i32
    return %arg0, %arg1 : i32, i32
  }
  func.func @transform_1(%arg0: i32, %arg1: i32) -> (i32, i32) {
    %c0_i32 = arith.constant 0 : i32
    %c0_i32_0 = arith.constant 0 : i32
    return %arg1, %c0_i32 : i32, i32
  }
  func.func @transform_2(%arg0: i32, %arg1: i32) -> (i32, i32) {
    %c0_i32 = arith.constant 0 : i32
    %c0_i32_0 = arith.constant 0 : i32
    %c0_i32_1 = arith.constant 0 : i32
    return %c0_i32, %c0_i32_0 : i32, i32
  }
  func.func @transform_3(%arg0: i32, %arg1: i32) -> (i32, i32) {
    %c0_i32 = arith.constant 0 : i32
    %c0_i32_0 = arith.constant 0 : i32
    %c0_i32_1 = arith.constant 0 : i32
    return %c0_i32, %c0_i32_0 : i32, i32
  }
  func.func @transform_4(%arg0: i32, %arg1: i32) -> (i32, i32) {
    %c0_i32 = arith.constant 0 : i32
    %c0_i32_0 = arith.constant 0 : i32
    return %arg0, %c0_i32 : i32, i32
  }
  func.func @transform_5(%arg0: i32, %arg1: i32) -> (i32, i32, i32) {
    %c0_i32 = arith.constant 0 : i32
    %c0_i32_0 = arith.constant 0 : i32
    %c0_i32_1 = arith.constant 0 : i32
    return %arg0, %c0_i32, %c0_i32_0 : i32, i32, i32
  }
  func.func @transform_6(%arg0: i32, %arg1: i32) -> (i32, i32, i32) {
    %c0_i32 = arith.constant 0 : i32
    %c0_i32_0 = arith.constant 0 : i32
    %c0_i32_1 = arith.constant 0 : i32
    return %arg0, %c0_i32, %c0_i32_0 : i32, i32, i32
  }
}

</mosaic_0001>

<llo_original>
// kernel: tpu_custom_call.1
$region0: #{tpu_custom_call.1}
  #allocation0 [shape = 'u32[]', space=smem, size = 0x4, offset = 0x4, fixed_abs, tag = 'smem constant byte address 0x4 - core index']
  #allocation1 [shape = 'u32[144,128]{1,0:T(1,128)}', space=vmem, size = 0x12000, scoped, tag = 'internal scratch']
  #allocation2 [shape = 'f32[256,4]{1,0:T(8,128)}', space=vmem, size = 0x20000, scoped, tag = 'scratch operand']
  %s0 = inlined_call_operand.hbm [shape: bf16[512,512], index: 0, kind: input, shape index: {}]
  %s1 = inlined_call_operand.vmem [shape: bf16[512,4], index: 1, kind: input, shape index: {}]
  %s2 = inlined_call_operand.vmem [shape: f32[4,128], index: 2, kind: input, shape index: {}]
  %s3 = inlined_call_operand.vmem [shape: f32[1,128], index: 3, kind: input, shape index: {}]
  %s4 = inlined_call_operand.hbm [shape: f32[512,128], index: 4, kind: output, shape index: {0}]
  %s5 = inlined_call_operand.hbm [shape: f32[2,1,128], index: 5, kind: output, shape index: {1}]
  %s6 = inlined_call_operand.hbm [shape: f32[2,1,128], index: 6, kind: output, shape index: {2}]
  %7 = xla_tuple %s4, %s5, %s6
  %s8 = sld [smem:[#allocation0]]
  $region77: #{tpu_custom_call.1} parent=0
    _
  %s10 = ssub.s32 1, %s8
  %s11 = scalar_select 0, %s10, %s8
  $region1: #{tpu_custom_call.1} parent=0
    #allocation3 [shape = 'u8[524288]{0}', space=vmem, size = 0x80000, scoped, tag = 'input window, operand 0']
    #allocation4 [shape = 's32[2]{0}', space=sflag, size = 0x8, scoped, tag = 'scoped memory for tpu_custom_call.1']
    #allocation5 [shape = 's32[2]{0}', space=sflag, size = 0x8, scoped, tag = 'scoped memory for tpu_custom_call.1']
    #allocation6 [shape = 'u8[262144]{0}', space=vmem, size = 0x40000, scoped, tag = 'output window, operand 0']
    #allocation7 [shape = 'u8[1024]{0}', space=vmem, size = 0x400, scoped, tag = 'output window, operand 1']
    #allocation8 [shape = 's32[2]{0}', space=sflag, size = 0x8, scoped, tag = 'scoped memory for tpu_custom_call.1']
    #allocation9 [shape = 'u8[1024]{0}', space=vmem, size = 0x400, scoped, tag = 'output window, operand 2']
    %12 = vsyncpa [#allocation4], 0
    %s13 = scalar_lea.sflag [#allocation4], 1
    %14 = vsyncpa %s13, 0
    %15 = vsyncpa [#allocation5], 0
    %s16 = scalar_lea.sflag [#allocation5], 1
    %17 = vsyncpa %s16, 0
    %18 = vsyncpa [#allocation8], 0
    %s19 = scalar_lea.sflag [#allocation8], 1
    %20 = vsyncpa %s19, 0
    loop: start=0, step=1, limit=4
    $region2: #{tpu_custom_call.1} parent=1 // loop_pre_header
      _
    $region3: #{tpu_custom_call.1} parent=1 // loop_header
      %s22 = sphi 0, %s26
      %p23 = scmp.ge.s32.totalorder %s22, 4
      %s29 = sphi 0, %s41
      %s30 = sphi 0, %s37
      %s31 = sphi 0, %s29
      %s32 = sphi 0, %s30
      %s33 = sphi 0, %s31
      %s34 = sphi 0, %s32
      %s46 = sphi 0, %s48
      %s49 = sphi 0, %s46
      %s50 = sphi 0, %s49
      %s66 = sphi 0, %s50
      %s72 = sphi 0, %s74
      %s75 = sphi 0, %s72
      %s76 = sphi 0, %s75
      %s92 = sphi 0, %s76
      %s96 = sphi 0, %s96
      %s98 = sphi 0, %s96
      %s99 = sphi 0, %s98
      %s113 = sphi 0, %s99
      %s117 = sphi 0, %s117
      %s119 = sphi 0, %s117
      %s120 = sphi 0, %s119
      %s134 = sphi 0, %s120
      %s140 = sphi 0, %s142
      %s143 = sphi 0, %s140
      %s144 = sphi 0, %s143
      %s160 = sphi 0, %s144
      %s166 = sphi 0, %s168
      %s169 = sphi 0, %s166
      %s170 = sphi 0, %s169
      %s186 = sphi 0, %s170
      %s192 = sphi 0, %s194
      %s195 = sphi 0, %s192
      %s196 = sphi 0, %s195
      %s212 = sphi 0, %s196
    $region4: #{tpu_custom_call.1} parent=1 // loop_header_branch
      %25 = sbr.rel (%p23) target = $region8
    $region5: #{tpu_custom_call.1} parent=1 // loop_body
      %s27 = ssub.s32 %s22, 1
      %s28 = ssub.s32 %s22, 2
      %s35 = sadd.s32 1, %s30
      %p36 = scmp.ge.s32.totalorder %s35, 1
      %s37 = scalar_select %p36, 0, %s35
      %s38 = sadd.s32 1, %s29
      %s39 = scalar_select %p36, %s38, %s29
      %p40 = scmp.ge.s32.totalorder %s39, 2
      %s41 = scalar_select %p40, 0, %s39
      %s42 = ssub.s32 %s29, %s41
      %s43 = ssub.s32 %s30, %s37
      %s44 = sor.u32 %s42, %s43
      %p45 = scmp.eq.s32.totalorder %s44, 0
      %s47 = sadd.s32 %s46, 1
      %s48 = scalar_select %p45, %s46, %s47
      %p51 = pneg %p45
      %p52 = scmp.eq.s32.totalorder %s22, 1
      %p53 = por %p51, %p52
      %p54 = scmp.ne.s32.totalorder %s46, %s49
      %p55 = scmp.eq.s32.totalorder %s22, 0
      %p56 = por %p54, %p55
      %p57 = scmp.ne.s32.totalorder %s46, %s49
      %p58 = scmp.eq.s32.totalorder %s27, 1
      %p59 = por %p57, %p58
      %p60 = scmp.ne.s32.totalorder %s49, %s50
      %p61 = scmp.eq.s32.totalorder %s27, 0
      %p62 = por %p60, %p61
      %p63 = scmp.ne.s32.totalorder %s49, %s50
      %p64 = scmp.eq.s32.totalorder %s28, 1
      %p65 = por %p63, %p64
      %p67 = scmp.ne.s32.totalorder %s50, %s66
      %p68 = scmp.eq.s32.totalorder %s28, 0
      %p69 = por %p67, %p68
      %s70 = ssub.s32 %s30, %s37
      %p71 = scmp.eq.s32.totalorder %s70, 0
      %s73 = sadd.s32 %s72, 1
      %s74 = scalar_select %p71, %s72, %s73
      %p77 = pneg %p71
      %p78 = scmp.eq.s32.totalorder %s22, 1
      %p79 = por %p77, %p78
      %p80 = scmp.ne.s32.totalorder %s72, %s75
      %p81 = scmp.eq.s32.totalorder %s22, 0
      %p82 = por %p80, %p81
      %p83 = scmp.ne.s32.totalorder %s72, %s75
      %p84 = scmp.eq.s32.totalorder %s27, 1
      %p85 = por %p83, %p84
      %p86 = scmp.ne.s32.totalorder %s75, %s76
      %p87 = scmp.eq.s32.totalorder %s27, 0
      %p88 = por %p86, %p87
      %p89 = scmp.ne.s32.totalorder %s75, %s76
      %p90 = scmp.eq.s32.totalorder %s28, 1
      %p91 = por %p89, %p90
      %p93 = scmp.ne.s32.totalorder %s76, %s92
      %p94 = scmp.eq.s32.totalorder %s28, 0
      %p95 = por %p93, %p94
      %s97 = sadd.s32 %s96, 1
      %p100 = scmp.eq.s32.totalorder %s22, 1
      %p101 = scmp.ne.s32.totalorder %s96, %s98
      %p102 = scmp.eq.s32.totalorder %s22, 0
      %p103 = por %p101, %p102
      %p104 = scmp.ne.s32.totalorder %s96, %s98
      %p105 = scmp.eq.s32.totalorder %s27, 1
      %p106 = por %p104, %p105
      %p107 = scmp.ne.s32.totalorder %s98, %s99
      %p108 = scmp.eq.s32.totalorder %s27, 0
      %p109 = por %p107, %p108
      %p110 = scmp.ne.s32.totalorder %s98, %s99
      %p111 = scmp.eq.s32.totalorder %s28, 1
      %p112 = por %p110, %p111
      %p114 = scmp.ne.s32.totalorder %s99, %s113
      %p115 = scmp.eq.s32.totalorder %s28, 0
      %p116 = por %p114, %p115
      %s118 = sadd.s32 %s117, 1
      %p121 = scmp.eq.s32.totalorder %s22, 1
      %p122 = scmp.ne.s32.totalorder %s117, %s119
      %p123 = scmp.eq.s32.totalorder %s22, 0
      %p124 = por %p122, %p123
      %p125 = scmp.ne.s32.totalorder %s117, %s119
      %p126 = scmp.eq.s32.totalorder %s27, 1
      %p127 = por %p125, %p126
      %p128 = scmp.ne.s32.totalorder %s119, %s120
      %p129 = scmp.eq.s32.totalorder %s27, 0
      %p130 = por %p128, %p129
      %p131 = scmp.ne.s32.totalorder %s119, %s120
      %p132 = scmp.eq.s32.totalorder %s28, 1
      %p133 = por %p131, %p132
      %p135 = scmp.ne.s32.totalorder %s120, %s134
      %p136 = scmp.eq.s32.totalorder %s28, 0
      %p137 = por %p135, %p136
      %s138 = ssub.s32 %s29, %s41
      %p139 = scmp.eq.s32.totalorder %s138, 0
      %s141 = sadd.s32 %s140, 1
      %s142 = scalar_select %p139, %s140, %s141
      %p145 = pneg %p139
      %p146 = scmp.eq.s32.totalorder %s22, 1
      %p147 = por %p145, %p146
      %p148 = scmp.ne.s32.totalorder %s140, %s143
      %p149 = scmp.eq.s32.totalorder %s22, 0
      %p150 = por %p148, %p149
      %p151 = scmp.ne.s32.totalorder %s140, %s143
      %p152 = scmp.eq.s32.totalorder %s27, 1
      %p153 = por %p151, %p152
      %p154 = scmp.ne.s32.totalorder %s143, %s144
      %p155 = scmp.eq.s32.totalorder %s27, 0
      %p156 = por %p154, %p155
      %p157 = scmp.ne.s32.totalorder %s143, %s144
      %p158 = scmp.eq.s32.totalorder %s28, 1
      %p159 = por %p157, %p158
      %p161 = scmp.ne.s32.totalorder %s144, %s160
      %p162 = scmp.eq.s32.totalorder %s28, 0
      %p163 = por %p161, %p162
      %s164 = ssub.s32 %s29, %s41
      %p165 = scmp.eq.s32.totalorder %s164, 0
      %s167 = sadd.s32 %s166, 1
      %s168 = scalar_select %p165, %s166, %s167
      %p171 = pneg %p165
      %p172 = scmp.eq.s32.totalorder %s22, 1
      %p173 = por %p171, %p172
      %p174 = scmp.ne.s32.totalorder %s166, %s169
      %p175 = scmp.eq.s32.totalorder %s22, 0
      %p176 = por %p174, %p175
      %p177 = scmp.ne.s32.totalorder %s166, %s169
      %p178 = scmp.eq.s32.totalorder %s27, 1
      %p179 = por %p177, %p178
      %p180 = scmp.ne.s32.totalorder %s169, %s170
      %p181 = scmp.eq.s32.totalorder %s27, 0
      %p182 = por %p180, %p181
      %p183 = scmp.ne.s32.totalorder %s169, %s170
      %p184 = scmp.eq.s32.totalorder %s28, 1
      %p185 = por %p183, %p184
      %p187 = scmp.ne.s32.totalorder %s170, %s186
      %p188 = scmp.eq.s32.totalorder %s28, 0
      %p189 = por %p187, %p188
      %s190 = ssub.s32 %s29, %s41
      %p191 = scmp.eq.s32.totalorder %s190, 0
      %s193 = sadd.s32 %s192, 1
      %s194 = scalar_select %p191, %s192, %s193
      %p197 = pneg %p191
      %p198 = scmp.eq.s32.totalorder %s22, 1
      %p199 = por %p197, %p198
      %p200 = scmp.ne.s32.totalorder %s192, %s195
      %p201 = scmp.eq.s32.totalorder %s22, 0
      %p202 = por %p200, %p201
      %p203 = scmp.ne.s32.totalorder %s192, %s195
      %p204 = scmp.eq.s32.totalorder %s27, 1
      %p205 = por %p203, %p204
      %p206 = scmp.ne.s32.totalorder %s195, %s196
      %p207 = scmp.eq.s32.totalorder %s27, 0
      %p208 = por %p206, %p207
      %p209 = scmp.ne.s32.totalorder %s195, %s196
      %p210 = scmp.eq.s32.totalorder %s28, 1
      %p211 = por %p209, %p210
      %p213 = scmp.ne.s32.totalorder %s196, %s212
      %p214 = scmp.eq.s32.totalorder %s28, 0
      %p215 = por %p213, %p214
      %p216 = scmp.le.s32.totalorder 1, %s22
      %p217 = scmp.lt.s32.totalorder %s22, 3
      %p218 = pnand %p216, %p217
      %p219 = pneg %p218
      // Predicated region
      $region9: #{tpu_custom_call.1} parent=5 // pred_check
        _
      $region10: #{tpu_custom_call.1} parent=5 // pred_check_branch
        %221 = sbr.rel (%p218) target = $region12
      $region11: #{tpu_custom_call.1} parent=5 // pred_region
        %s222 = ssub.s32 %s22, 1
        // Predicated region
        $region13: #{tpu_custom_call.1} parent=11 // pred_check
          %p223 = pneg %p88
        $region14: #{tpu_custom_call.1} parent=11 // pred_check_branch
          %225 = sbr.rel (%p223) target = $region16
        $region15: #{tpu_custom_call.1} parent=11 // pred_region
          %s226 = smul.u32 64, %s32
          %p227 = scmp.lt.s32.totalorder %s226, 63
          %s228 = scalar_select %p227, %s226, 63
          %s229 = smul.addr %s228, 4
          %s230 = scalar_lea.vmem %s1, %s229
          %s231 = smul.u32 64, %s32
        $region16: #{tpu_custom_call.1} parent=11 // pred_fallthru
          _
        // Predicated region
        $region17: #{tpu_custom_call.1} parent=11 // pred_check
          %p232 = pneg %p109
        $region18: #{tpu_custom_call.1} parent=11 // pred_check_branch
          %234 = sbr.rel (%p232) target = $region20
        $region19: #{tpu_custom_call.1} parent=11 // pred_region
          _
        $region20: #{tpu_custom_call.1} parent=11 // pred_fallthru
          _
        // Predicated region
        $region21: #{tpu_custom_call.1} parent=11 // pred_check
          %p235 = pneg %p130
        $region22: #{tpu_custom_call.1} parent=11 // pred_check_branch
          %237 = sbr.rel (%p235) target = $region24
        $region23: #{tpu_custom_call.1} parent=11 // pred_region
          _
        $region24: #{tpu_custom_call.1} parent=11 // pred_fallthru
          _
      $region12: #{tpu_custom_call.1} parent=5 // pred_fallthru
        _
      %p238 = scmp.lt.s32.totalorder %s22, 2
      // Predicated region
      $region25: #{tpu_custom_call.1} parent=5 // pred_check
        %p239 = pneg %p238
      $region26: #{tpu_custom_call.1} parent=5 // pred_check_branch
        %241 = sbr.rel (%p239) target = $region28
      $region27: #{tpu_custom_call.1} parent=5 // pred_region
        // Predicated region
        $region29: #{tpu_custom_call.1} parent=27 // pred_check
          %p242 = pneg %p56
        $region30: #{tpu_custom_call.1} parent=27 // pred_check_branch
          %244 = sbr.rel (%p242) target = $region32
        $region31: #{tpu_custom_call.1} parent=27 // pred_region
          %s245 = sand.u32 %s46, 1
          %s246 = scalar_lea.sflag [#allocation4], %s245
          %s247 = sand.u32 %s46, 1
          %s248 = smul.addr %s247, 512
          %s249 = scalar_lea.vmem [#allocation3], %s248
          %s250 = smul.u32 32, %s29
          %s251 = smul.u32 4, %s30
          %s253 = ssub.s32 8192, 8192
          %254 = vsyncadd %s246, %s253
          %s255 = smul.addr %s250, 4
          %s256 = sadd.s32 %s251, %s255
          %s257 = smul.addr %s256, 64
          %s258 = scalar_lea.hbm %s0, %s257
          %s259 = sshll.u32 %s249, 4
          %s260 = int_to_ptr.vmem [resolvable:$true] %s259
          %265 = dma.hbm_to_vmem [thread:$0]  %s258, 8192, %s260, %s246, 256, 256, 16
        $region32: #{tpu_custom_call.1} parent=27 // pred_fallthru
          _
      $region28: #{tpu_custom_call.1} parent=5 // pred_fallthru
        _
      %p266 = scmp.le.s32.totalorder 1, %s22
      %p267 = scmp.lt.s32.totalorder %s22, 3
      %p268 = pnand %p266, %p267
      %p269 = pneg %p268
      // Predicated region
      $region33: #{tpu_custom_call.1} parent=5 // pred_check
        _
      $region34: #{tpu_custom_call.1} parent=5 // pred_check_branch
        %271 = sbr.rel (%p268) target = $region36
      $region35: #{tpu_custom_call.1} parent=5 // pred_region
        %s272 = ssub.s32 %s22, 1
        %s273 = sand.u32 %s49, 1
        %s274 = scalar_lea.sflag [#allocation4], %s273
        %s275 = sand.u32 %s49, 1
        %s276 = smul.addr %s275, 512
        %s277 = scalar_lea.vmem [#allocation3], %s276
        // Predicated region
        $region37: #{tpu_custom_call.1} parent=35 // pred_check
          %p278 = pneg %p62
        $region38: #{tpu_custom_call.1} parent=35 // pred_check_branch
          %280 = sbr.rel (%p278) target = $region40
        $region39: #{tpu_custom_call.1} parent=35 // pred_region
          %281 = dma.done %s274, 8192
        $region40: #{tpu_custom_call.1} parent=35 // pred_fallthru
          _
        %s282 = sand.u32 %s49, 1
        %s283 = scalar_lea.sflag [#allocation4], %s282
        %s284 = sand.u32 %s49, 1
        %s285 = smul.addr %s284, 512
        %s286 = scalar_lea.vmem [#allocation3], %s285
        %p287 = pneg %p62
        %p288 = pneg %p59
        %s289 = smul.u32 64, %s32
        %p290 = scmp.lt.s32.totalorder %s289, 63
        %s291 = scalar_select %p290, %s289, 63
        %s292 = smul.addr %s291, 4
        %s293 = scalar_lea.vmem %s1, %s292
        %p294 = pneg %p88
        %p295 = pneg %p85
        %p296 = pneg %p109
        %p297 = pneg %p106
        %p298 = pneg %p130
        %p299 = pneg %p127
        %p300 = pneg %p156
        %p301 = pneg %p153
        %s302 = sand.u32 %s143, 1
        %s303 = scalar_lea.sflag [#allocation5], %s302
        %s304 = sand.u32 %s143, 1
        %s305 = smul.addr %s304, 256
        %s306 = scalar_lea.vmem [#allocation6], %s305
        %p307 = pneg %p182
        %p308 = pneg %p179
        %s309 = sand.u32 %s27, 1
        %s310 = scalar_lea.sflag [#allocation8], %s309
        %s311 = sand.u32 %s169, 1
        %s312 = scalar_lea.vmem [#allocation7], %s311
        %p313 = pneg %p208
        %p314 = pneg %p205
        %s315 = sand.u32 %s27, 1
        %s316 = scalar_lea.sflag [#allocation8], %s315
        %s317 = sand.u32 %s195, 1
        %s318 = scalar_lea.vmem [#allocation9], %s317
        %s319 = smul.u32 32, %s31
        %s320 = smul.u32 4, %s32
        %s321 = smul.u32 64, %s32
        %p322 = scmp.lt.s32.totalorder %s321, 63
        %s323 = scalar_select %p322, %s321, 63
        %s324 = smul.addr %s323, 4
        %s325 = scalar_lea.vmem %s1, %s324
        %s326 = smul.u32 64, %s32
        %s327 = smul.u32 32, %s31
        %p329 = scmp.eq.s32.totalorder %s32, 0
        // Predicated region
        $region41: #{tpu_custom_call.1} parent=35 // pred_check
          %p330 = pneg %p329
        $region42: #{tpu_custom_call.1} parent=35 // pred_check_branch
          %332 = sbr.rel (%p330) target = $region44
        $region43: #{tpu_custom_call.1} parent=35 // pred_region
          %vm333 = vcmask 31744
          %334 = vst.msk [vmem:[#allocation2] sm:$0xff] %vm333, 0.0
          %335 = vst.msk [vmem:[#allocation2 + $0x8] sm:$0xff] %vm333, 0.0
          %336 = vst.msk [vmem:[#allocation2 + $0x10] sm:$0xff] %vm333, 0.0
          %337 = vst.msk [vmem:[#allocation2 + $0x18] sm:$0xff] %vm333, 0.0
          %338 = vst.msk [vmem:[#allocation2 + $0x20] sm:$0xff] %vm333, 0.0
          %339 = vst.msk [vmem:[#allocation2 + $0x28] sm:$0xff] %vm333, 0.0
          %340 = vst.msk [vmem:[#allocation2 + $0x30] sm:$0xff] %vm333, 0.0
          %341 = vst.msk [vmem:[#allocation2 + $0x38] sm:$0xff] %vm333, 0.0
          %342 = vst.msk [vmem:[#allocation2 + $0x40] sm:$0xff] %vm333, 0.0
          %343 = vst.msk [vmem:[#allocation2 + $0x48] sm:$0xff] %vm333, 0.0
          %344 = vst.msk [vmem:[#allocation2 + $0x50] sm:$0xff] %vm333, 0.0
          %345 = vst.msk [vmem:[#allocation2 + $0x58] sm:$0xff] %vm333, 0.0
          %346 = vst.msk [vmem:[#allocation2 + $0x60] sm:$0xff] %vm333, 0.0
          %347 = vst.msk [vmem:[#allocation2 + $0x68] sm:$0xff] %vm333, 0.0
          %348 = vst.msk [vmem:[#allocation2 + $0x70] sm:$0xff] %vm333, 0.0
          %349 = vst.msk [vmem:[#allocation2 + $0x78] sm:$0xff] %vm333, 0.0
          %350 = vst.msk [vmem:[#allocation2 + $0x80] sm:$0xff] %vm333, 0.0
          %351 = vst.msk [vmem:[#allocation2 + $0x88] sm:$0xff] %vm333, 0.0
          %352 = vst.msk [vmem:[#allocation2 + $0x90] sm:$0xff] %vm333, 0.0
          %353 = vst.msk [vmem:[#allocation2 + $0x98] sm:$0xff] %vm333, 0.0
          %354 = vst.msk [vmem:[#allocation2 + $0xa0] sm:$0xff] %vm333, 0.0
          %355 = vst.msk [vmem:[#allocation2 + $0xa8] sm:$0xff] %vm333, 0.0
          %356 = vst.msk [vmem:[#allocation2 + $0xb0] sm:$0xff] %vm333, 0.0
          %357 = vst.msk [vmem:[#allocation2 + $0xb8] sm:$0xff] %vm333, 0.0
          %358 = vst.msk [vmem:[#allocation2 + $0xc0] sm:$0xff] %vm333, 0.0
          %359 = vst.msk [vmem:[#allocation2 + $0xc8] sm:$0xff] %vm333, 0.0
          %360 = vst.msk [vmem:[#allocation2 + $0xd0] sm:$0xff] %vm333, 0.0
          %361 = vst.msk [vmem:[#allocation2 + $0xd8] sm:$0xff] %vm333, 0.0
          %362 = vst.msk [vmem:[#allocation2 + $0xe0] sm:$0xff] %vm333, 0.0
          %363 = vst.msk [vmem:[#allocation2 + $0xe8] sm:$0xff] %vm333, 0.0
          %364 = vst.msk [vmem:[#allocation2 + $0xf0] sm:$0xff] %vm333, 0.0
          %365 = vst.msk [vmem:[#allocation2 + $0xf8] sm:$0xff] %vm333, 0.0
        $region44: #{tpu_custom_call.1} parent=35 // pred_fallthru
          _
        %v366 = vld [vmem:[#allocation2] sm:$0xff]
        %v367 = vld [vmem:[#allocation2 + $0x8] sm:$0xff]
        %v368 = vld [vmem:[#allocation2 + $0x10] sm:$0xff]
        %v369 = vld [vmem:[#allocation2 + $0x18] sm:$0xff]
        %v370 = vld [vmem:[#allocation2 + $0x20] sm:$0xff]
        %v371 = vld [vmem:[#allocation2 + $0x28] sm:$0xff]
        %v372 = vld [vmem:[#allocation2 + $0x30] sm:$0xff]
        %v373 = vld [vmem:[#allocation2 + $0x38] sm:$0xff]
        %v374 = vld [vmem:[#allocation2 + $0x40] sm:$0xff]
        %v375 = vld [vmem:[#allocation2 + $0x48] sm:$0xff]
        %v376 = vld [vmem:[#allocation2 + $0x50] sm:$0xff]
        %v377 = vld [vmem:[#allocation2 + $0x58] sm:$0xff]
        %v378 = vld [vmem:[#allocation2 + $0x60] sm:$0xff]
        %v379 = vld [vmem:[#allocation2 + $0x68] sm:$0xff]
        %v380 = vld [vmem:[#allocation2 + $0x70] sm:$0xff]
        %v381 = vld [vmem:[#allocation2 + $0x78] sm:$0xff]
        %v382 = vld [vmem:[#allocation2 + $0x80] sm:$0xff]
        %v383 = vld [vmem:[#allocation2 + $0x88] sm:$0xff]
        %v384 = vld [vmem:[#allocation2 + $0x90] sm:$0xff]
        %v385 = vld [vmem:[#allocation2 + $0x98] sm:$0xff]
        %v386 = vld [vmem:[#allocation2 + $0xa0] sm:$0xff]
        %v387 = vld [vmem:[#allocation2 + $0xa8] sm:$0xff]
        %v388 = vld [vmem:[#allocation2 + $0xb0] sm:$0xff]
        %v389 = vld [vmem:[#allocation2 + $0xb8] sm:$0xff]
        %v390 = vld [vmem:[#allocation2 + $0xc0] sm:$0xff]
        %v391 = vld [vmem:[#allocation2 + $0xc8] sm:$0xff]
        %v392 = vld [vmem:[#allocation2 + $0xd0] sm:$0xff]
        %v393 = vld [vmem:[#allocation2 + $0xd8] sm:$0xff]
        %v394 = vld [vmem:[#allocation2 + $0xe0] sm:$0xff]
        %v395 = vld [vmem:[#allocation2 + $0xe8] sm:$0xff]
        %v396 = vld [vmem:[#allocation2 + $0xf0] sm:$0xff]
        %v397 = vld [vmem:[#allocation2 + $0xf8] sm:$0xff]
        %v398 = vld [vmem:[%s277] sm:$0xff]
        %v399 = vld [vmem:[%s277 + $0x8] sm:$0xff]
        %v400 = vld [vmem:[%s277 + $0x10] sm:$0xff]
        %v401 = vld [vmem:[%s277 + $0x18] sm:$0xff]
        %v402 = vld [vmem:[%s277 + $0x20] sm:$0xff]
        %v403 = vld [vmem:[%s277 + $0x28] sm:$0xff]
        %v404 = vld [vmem:[%s277 + $0x30] sm:$0xff]
        %v405 = vld [vmem:[%s277 + $0x38] sm:$0xff]
        %v406 = vld [vmem:[%s277 + $0x40] sm:$0xff]
        %v407 = vld [vmem:[%s277 + $0x48] sm:$0xff]
        %v408 = vld [vmem:[%s277 + $0x50] sm:$0xff]
        %v409 = vld [vmem:[%s277 + $0x58] sm:$0xff]
        %v410 = vld [vmem:[%s277 + $0x60] sm:$0xff]
        %v411 = vld [vmem:[%s277 + $0x68] sm:$0xff]
        %v412 = vld [vmem:[%s277 + $0x70] sm:$0xff]
        %v413 = vld [vmem:[%s277 + $0x78] sm:$0xff]
        %v414 = vld [vmem:[%s277 + $0x80] sm:$0xff]
        %v415 = vld [vmem:[%s277 + $0x88] sm:$0xff]
        %v416 = vld [vmem:[%s277 + $0x90] sm:$0xff]
        %v417 = vld [vmem:[%s277 + $0x98] sm:$0xff]
        %v418 = vld [vmem:[%s277 + $0xa0] sm:$0xff]
        %v419 = vld [vmem:[%s277 + $0xa8] sm:$0xff]
        %v420 = vld [vmem:[%s277 + $0xb0] sm:$0xff]
        %v421 = vld [vmem:[%s277 + $0xb8] sm:$0xff]
        %v422 = vld [vmem:[%s277 + $0xc0] sm:$0xff]
        %v423 = vld [vmem:[%s277 + $0xc8] sm:$0xff]
        %v424 = vld [vmem:[%s277 + $0xd0] sm:$0xff]
        %v425 = vld [vmem:[%s277 + $0xd8] sm:$0xff]
        %v426 = vld [vmem:[%s277 + $0xe0] sm:$0xff]
        %v427 = vld [vmem:[%s277 + $0xe8] sm:$0xff]
        %v428 = vld [vmem:[%s277 + $0xf0] sm:$0xff]
        %v429 = vld [vmem:[%s277 + $0xf8] sm:$0xff]
        %v430 = vld [vmem:[%s277 + $0x100] sm:$0xff]
        %v431 = vld [vmem:[%s277 + $0x108] sm:$0xff]
        %v432 = vld [vmem:[%s277 + $0x110] sm:$0xff]
        %v433 = vld [vmem:[%s277 + $0x118] sm:$0xff]
        %v434 = vld [vmem:[%s277 + $0x120] sm:$0xff]
        %v435 = vld [vmem:[%s277 + $0x128] sm:$0xff]
        %v436 = vld [vmem:[%s277 + $0x130] sm:$0xff]
        %v437 = vld [vmem:[%s277 + $0x138] sm:$0xff]
        %v438 = vld [vmem:[%s277 + $0x140] sm:$0xff]
        %v439 = vld [vmem:[%s277 + $0x148] sm:$0xff]
        %v440 = vld [vmem:[%s277 + $0x150] sm:$0xff]
        %v441 = vld [vmem:[%s277 + $0x158] sm:$0xff]
        %v442 = vld [vmem:[%s277 + $0x160] sm:$0xff]
        %v443 = vld [vmem:[%s277 + $0x168] sm:$0xff]
        %v444 = vld [vmem:[%s277 + $0x170] sm:$0xff]
        %v445 = vld [vmem:[%s277 + $0x178] sm:$0xff]
        %v446 = vld [vmem:[%s277 + $0x180] sm:$0xff]
        %v447 = vld [vmem:[%s277 + $0x188] sm:$0xff]
        %v448 = vld [vmem:[%s277 + $0x190] sm:$0xff]
        %v449 = vld [vmem:[%s277 + $0x198] sm:$0xff]
        %v450 = vld [vmem:[%s277 + $0x1a0] sm:$0xff]
        %v451 = vld [vmem:[%s277 + $0x1a8] sm:$0xff]
        %v452 = vld [vmem:[%s277 + $0x1b0] sm:$0xff]
        %v453 = vld [vmem:[%s277 + $0x1b8] sm:$0xff]
        %v454 = vld [vmem:[%s277 + $0x1c0] sm:$0xff]
        %v455 = vld [vmem:[%s277 + $0x1c8] sm:$0xff]
        %v456 = vld [vmem:[%s277 + $0x1d0] sm:$0xff]
        %v457 = vld [vmem:[%s277 + $0x1d8] sm:$0xff]
        %v458 = vld [vmem:[%s277 + $0x1e0] sm:$0xff]
        %v459 = vld [vmem:[%s277 + $0x1e8] sm:$0xff]
        %v460 = vld [vmem:[%s277 + $0x1f0] sm:$0xff]
        %v461 = vld [vmem:[%s277 + $0x1f8] sm:$0xff]
        %v462 = vld [vmem:[%s325] sm:$0xf]
        %v463 = vld [vmem:[%s325 + $0x4] sm:$0xf]
        %v464 = vld [vmem:[%s325 + $0x8] sm:$0xf]
        %v465 = vld [vmem:[%s325 + $0xc] sm:$0xf]
        %v466 = vld [vmem:[%s325 + $0x10] sm:$0xf]
        %v467 = vld [vmem:[%s325 + $0x14] sm:$0xf]
        %v468 = vld [vmem:[%s325 + $0x18] sm:$0xf]
        %v469 = vld [vmem:[%s325 + $0x1c] sm:$0xf]
        %v470 = vld [vmem:[%s325 + $0x20] sm:$0xf]
        %v471 = vld [vmem:[%s325 + $0x24] sm:$0xf]
        %v472 = vld [vmem:[%s325 + $0x28] sm:$0xf]
        %v473 = vld [vmem:[%s325 + $0x2c] sm:$0xf]
        %v474 = vld [vmem:[%s325 + $0x30] sm:$0xf]
        %v475 = vld [vmem:[%s325 + $0x34] sm:$0xf]
        %v476 = vld [vmem:[%s325 + $0x38] sm:$0xf]
        %v477 = vld [vmem:[%s325 + $0x3c] sm:$0xf]
        %v478 = vld [vmem:[%s325 + $0x40] sm:$0xf]
        %v479 = vld [vmem:[%s325 + $0x44] sm:$0xf]
        %v480 = vld [vmem:[%s325 + $0x48] sm:$0xf]
        %v481 = vld [vmem:[%s325 + $0x4c] sm:$0xf]
        %v482 = vld [vmem:[%s325 + $0x50] sm:$0xf]
        %v483 = vld [vmem:[%s325 + $0x54] sm:$0xf]
        %v484 = vld [vmem:[%s325 + $0x58] sm:$0xf]
        %v485 = vld [vmem:[%s325 + $0x5c] sm:$0xf]
        %v486 = vld [vmem:[%s325 + $0x60] sm:$0xf]
        %v487 = vld [vmem:[%s325 + $0x64] sm:$0xf]
        %v488 = vld [vmem:[%s325 + $0x68] sm:$0xf]
        %v489 = vld [vmem:[%s325 + $0x6c] sm:$0xf]
        %v490 = vld [vmem:[%s325 + $0x70] sm:$0xf]
        %v491 = vld [vmem:[%s325 + $0x74] sm:$0xf]
        %v492 = vld [vmem:[%s325 + $0x78] sm:$0xf]
        %v493 = vld [vmem:[%s325 + $0x7c] sm:$0xf]
        %v494 = vld [vmem:[%s325 + $0x80] sm:$0xf]
        %v495 = vld [vmem:[%s325 + $0x84] sm:$0xf]
        %v496 = vld [vmem:[%s325 + $0x88] sm:$0xf]
        %v497 = vld [vmem:[%s325 + $0x8c] sm:$0xf]
        %v498 = vld [vmem:[%s325 + $0x90] sm:$0xf]
        %v499 = vld [vmem:[%s325 + $0x94] sm:$0xf]
        %v500 = vld [vmem:[%s325 + $0x98] sm:$0xf]
        %v501 = vld [vmem:[%s325 + $0x9c] sm:$0xf]
        %v502 = vld [vmem:[%s325 + $0xa0] sm:$0xf]
        %v503 = vld [vmem:[%s325 + $0xa4] sm:$0xf]
        %v504 = vld [vmem:[%s325 + $0xa8] sm:$0xf]
        %v505 = vld [vmem:[%s325 + $0xac] sm:$0xf]
        %v506 = vld [vmem:[%s325 + $0xb0] sm:$0xf]
        %v507 = vld [vmem:[%s325 + $0xb4] sm:$0xf]
        %v508 = vld [vmem:[%s325 + $0xb8] sm:$0xf]
        %v509 = vld [vmem:[%s325 + $0xbc] sm:$0xf]
        %v510 = vld [vmem:[%s325 + $0xc0] sm:$0xf]
        %v511 = vld [vmem:[%s325 + $0xc4] sm:$0xf]
        %v512 = vld [vmem:[%s325 + $0xc8] sm:$0xf]
        %v513 = vld [vmem:[%s325 + $0xcc] sm:$0xf]
        %v514 = vld [vmem:[%s325 + $0xd0] sm:$0xf]
        %v515 = vld [vmem:[%s325 + $0xd4] sm:$0xf]
        %v516 = vld [vmem:[%s325 + $0xd8] sm:$0xf]
        %v517 = vld [vmem:[%s325 + $0xdc] sm:$0xf]
        %v518 = vld [vmem:[%s325 + $0xe0] sm:$0xf]
        %v519 = vld [vmem:[%s325 + $0xe4] sm:$0xf]
        %v520 = vld [vmem:[%s325 + $0xe8] sm:$0xf]
        %v521 = vld [vmem:[%s325 + $0xec] sm:$0xf]
        %v522 = vld [vmem:[%s325 + $0xf0] sm:$0xf]
        %v523 = vld [vmem:[%s325 + $0xf4] sm:$0xf]
        %v524 = vld [vmem:[%s325 + $0xf8] sm:$0xf]
        %v525 = vld [vmem:[%s325 + $0xfc] sm:$0xf]
        %v590 = vunpack.c.l.b16 %v398
        %v591 = vunpack.c.h.b16 %v398
        %v592 = vunpack.c.l.b16 %v399
        %v593 = vunpack.c.h.b16 %v399
        %v594 = vunpack.c.l.b16 %v400
        %v595 = vunpack.c.h.b16 %v400
        %v596 = vunpack.c.l.b16 %v401
        %v597 = vunpack.c.h.b16 %v401
        %v598 = vunpack.c.l.b16 %v402
        %v599 = vunpack.c.h.b16 %v402
        %v600 = vunpack.c.l.b16 %v403
        %v601 = vunpack.c.h.b16 %v403
        %v602 = vunpack.c.l.b16 %v404
        %v603 = vunpack.c.h.b16 %v404
        %v604 = vunpack.c.l.b16 %v405
        %v605 = vunpack.c.h.b16 %v405
        %v606 = vunpack.c.l.b16 %v406
        %v607 = vunpack.c.h.b16 %v406
        %v608 = vunpack.c.l.b16 %v407
        %v609 = vunpack.c.h.b16 %v407
        %v610 = vunpack.c.l.b16 %v408
        %v611 = vunpack.c.h.b16 %v408
        %v612 = vunpack.c.l.b16 %v409
        %v613 = vunpack.c.h.b16 %v409
        %v614 = vunpack.c.l.b16 %v410
        %v615 = vunpack.c.h.b16 %v410
        %v616 = vunpack.c.l.b16 %v411
        %v617 = vunpack.c.h.b16 %v411
        %v618 = vunpack.c.l.b16 %v412
        %v619 = vunpack.c.h.b16 %v412
        %v620 = vunpack.c.l.b16 %v413
        %v621 = vunpack.c.h.b16 %v413
        %v622 = vunpack.c.l.b16 %v414
        %v623 = vunpack.c.h.b16 %v414
        %v624 = vunpack.c.l.b16 %v415
        %v625 = vunpack.c.h.b16 %v415
        %v626 = vunpack.c.l.b16 %v416
        %v627 = vunpack.c.h.b16 %v416
        %v628 = vunpack.c.l.b16 %v417
        %v629 = vunpack.c.h.b16 %v417
        %v630 = vunpack.c.l.b16 %v418
        %v631 = vunpack.c.h.b16 %v418
        %v632 = vunpack.c.l.b16 %v419
        %v633 = vunpack.c.h.b16 %v419
        %v634 = vunpack.c.l.b16 %v420
        %v635 = vunpack.c.h.b16 %v420
        %v636 = vunpack.c.l.b16 %v421
        %v637 = vunpack.c.h.b16 %v421
        %v638 = vunpack.c.l.b16 %v422
        %v639 = vunpack.c.h.b16 %v422
        %v640 = vunpack.c.l.b16 %v423
        %v641 = vunpack.c.h.b16 %v423
        %v642 = vunpack.c.l.b16 %v424
        %v643 = vunpack.c.h.b16 %v424
        %v644 = vunpack.c.l.b16 %v425
        %v645 = vunpack.c.h.b16 %v425
        %v646 = vunpack.c.l.b16 %v426
        %v647 = vunpack.c.h.b16 %v426
        %v648 = vunpack.c.l.b16 %v427
        %v649 = vunpack.c.h.b16 %v427
        %v650 = vunpack.c.l.b16 %v428
        %v651 = vunpack.c.h.b16 %v428
        %v652 = vunpack.c.l.b16 %v429
        %v653 = vunpack.c.h.b16 %v429
        %v654 = vunpack.c.l.b16 %v430
        %v655 = vunpack.c.h.b16 %v430
        %v656 = vunpack.c.l.b16 %v431
        %v657 = vunpack.c.h.b16 %v431
        %v658 = vunpack.c.l.b16 %v432
        %v659 = vunpack.c.h.b16 %v432
        %v660 = vunpack.c.l.b16 %v433
        %v661 = vunpack.c.h.b16 %v433
        %v662 = vunpack.c.l.b16 %v434
        %v663 = vunpack.c.h.b16 %v434
        %v664 = vunpack.c.l.b16 %v435
        %v665 = vunpack.c.h.b16 %v435
        %v666 = vunpack.c.l.b16 %v436
        %v667 = vunpack.c.h.b16 %v436
        %v668 = vunpack.c.l.b16 %v437
        %v669 = vunpack.c.h.b16 %v437
        %v670 = vunpack.c.l.b16 %v438
        %v671 = vunpack.c.h.b16 %v438
        %v672 = vunpack.c.l.b16 %v439
        %v673 = vunpack.c.h.b16 %v439
        %v674 = vunpack.c.l.b16 %v440
        %v675 = vunpack.c.h.b16 %v440
        %v676 = vunpack.c.l.b16 %v441
        %v677 = vunpack.c.h.b16 %v441
        %v678 = vunpack.c.l.b16 %v442
        %v679 = vunpack.c.h.b16 %v442
        %v680 = vunpack.c.l.b16 %v443
        %v681 = vunpack.c.h.b16 %v443
        %v682 = vunpack.c.l.b16 %v444
        %v683 = vunpack.c.h.b16 %v444
        %v684 = vunpack.c.l.b16 %v445
        %v685 = vunpack.c.h.b16 %v445
        %v686 = vunpack.c.l.b16 %v446
        %v687 = vunpack.c.h.b16 %v446
        %v688 = vunpack.c.l.b16 %v447
        %v689 = vunpack.c.h.b16 %v447
        %v690 = vunpack.c.l.b16 %v448
        %v691 = vunpack.c.h.b16 %v448
        %v692 = vunpack.c.l.b16 %v449
        %v693 = vunpack.c.h.b16 %v449
        %v694 = vunpack.c.l.b16 %v450
        %v695 = vunpack.c.h.b16 %v450
        %v696 = vunpack.c.l.b16 %v451
        %v697 = vunpack.c.h.b16 %v451
        %v698 = vunpack.c.l.b16 %v452
        %v699 = vunpack.c.h.b16 %v452
        %v700 = vunpack.c.l.b16 %v453
        %v701 = vunpack.c.h.b16 %v453
        %v702 = vunpack.c.l.b16 %v454
        %v703 = vunpack.c.h.b16 %v454
        %v704 = vunpack.c.l.b16 %v455
        %v705 = vunpack.c.h.b16 %v455
        %v706 = vunpack.c.l.b16 %v456
        %v707 = vunpack.c.h.b16 %v456
        %v708 = vunpack.c.l.b16 %v457
        %v709 = vunpack.c.h.b16 %v457
        %v710 = vunpack.c.l.b16 %v458
        %v711 = vunpack.c.h.b16 %v458
        %v712 = vunpack.c.l.b16 %v459
        %v713 = vunpack.c.h.b16 %v459
        %v714 = vunpack.c.l.b16 %v460
        %v715 = vunpack.c.h.b16 %v460
        %v716 = vunpack.c.l.b16 %v461
        %v717 = vunpack.c.h.b16 %v461
        %v718 = vpack.c.b16 %v594, %v590
        %v719 = vpack.c.b16 %v595, %v591
        %v720 = vpack.c.b16 %v596, %v592
        %v721 = vpack.c.b16 %v597, %v593
        %v722 = vpack.c.b16 %v602, %v598
        %v723 = vpack.c.b16 %v603, %v599
        %v724 = vpack.c.b16 %v604, %v600
        %v725 = vpack.c.b16 %v605, %v601
        %v726 = vpack.c.b16 %v610, %v606
        %v727 = vpack.c.b16 %v611, %v607
        %v728 = vpack.c.b16 %v612, %v608
        %v729 = vpack.c.b16 %v613, %v609
        %v730 = vpack.c.b16 %v618, %v614
        %v731 = vpack.c.b16 %v619, %v615
        %v732 = vpack.c.b16 %v620, %v616
        %v733 = vpack.c.b16 %v621, %v617
        %v734 = vpack.c.b16 %v626, %v622
        %v735 = vpack.c.b16 %v627, %v623
        %v736 = vpack.c.b16 %v628, %v624
        %v737 = vpack.c.b16 %v629, %v625
        %v738 = vpack.c.b16 %v634, %v630
        %v739 = vpack.c.b16 %v635, %v631
        %v740 = vpack.c.b16 %v636, %v632
        %v741 = vpack.c.b16 %v637, %v633
        %v742 = vpack.c.b16 %v642, %v638
        %v743 = vpack.c.b16 %v643, %v639
        %v744 = vpack.c.b16 %v644, %v640
        %v745 = vpack.c.b16 %v645, %v641
        %v746 = vpack.c.b16 %v650, %v646
        %v747 = vpack.c.b16 %v651, %v647
        %v748 = vpack.c.b16 %v652, %v648
        %v749 = vpack.c.b16 %v653, %v649
        %v750 = vpack.c.b16 %v658, %v654
        %v751 = vpack.c.b16 %v659, %v655
        %v752 = vpack.c.b16 %v660, %v656
        %v753 = vpack.c.b16 %v661, %v657
        %v754 = vpack.c.b16 %v666, %v662
        %v755 = vpack.c.b16 %v667, %v663
        %v756 = vpack.c.b16 %v668, %v664
        %v757 = vpack.c.b16 %v669, %v665
        %v758 = vpack.c.b16 %v674, %v670
        %v759 = vpack.c.b16 %v675, %v671
        %v760 = vpack.c.b16 %v676, %v672
        %v761 = vpack.c.b16 %v677, %v673
        %v762 = vpack.c.b16 %v682, %v678
        %v763 = vpack.c.b16 %v683, %v679
        %v764 = vpack.c.b16 %v684, %v680
        %v765 = vpack.c.b16 %v685, %v681
        %v766 = vpack.c.b16 %v690, %v686
        %v767 = vpack.c.b16 %v691, %v687
        %v768 = vpack.c.b16 %v692, %v688
        %v769 = vpack.c.b16 %v693, %v689
        %v770 = vpack.c.b16 %v698, %v694
        %v771 = vpack.c.b16 %v699, %v695
        %v772 = vpack.c.b16 %v700, %v696
        %v773 = vpack.c.b16 %v701, %v697
        %v774 = vpack.c.b16 %v706, %v702
        %v775 = vpack.c.b16 %v707, %v703
        %v776 = vpack.c.b16 %v708, %v704
        %v777 = vpack.c.b16 %v709, %v705
        %v778 = vpack.c.b16 %v714, %v710
        %v779 = vpack.c.b16 %v715, %v711
        %v780 = vpack.c.b16 %v716, %v712
        %v781 = vpack.c.b16 %v717, %v713
        %v910 = vunpack.c.l.b16 %v462
        %v911 = vunpack.c.l.b16 %v463
        %v912 = vunpack.c.l.b16 %v464
        %v913 = vunpack.c.l.b16 %v465
        %v914 = vunpack.c.l.b16 %v466
        %v915 = vunpack.c.l.b16 %v467
        %v916 = vunpack.c.l.b16 %v468
        %v917 = vunpack.c.l.b16 %v469
        %v918 = vunpack.c.l.b16 %v470
        %v919 = vunpack.c.l.b16 %v471
        %v920 = vunpack.c.l.b16 %v472
        %v921 = vunpack.c.l.b16 %v473
        %v922 = vunpack.c.l.b16 %v474
        %v923 = vunpack.c.l.b16 %v475
        %v924 = vunpack.c.l.b16 %v476
        %v925 = vunpack.c.l.b16 %v477
        %v926 = vunpack.c.l.b16 %v478
        %v927 = vunpack.c.l.b16 %v479
        %v928 = vunpack.c.l.b16 %v480
        %v929 = vunpack.c.l.b16 %v481
        %v930 = vunpack.c.l.b16 %v482
        %v931 = vunpack.c.l.b16 %v483
        %v932 = vunpack.c.l.b16 %v484
        %v933 = vunpack.c.l.b16 %v485
        %v934 = vunpack.c.l.b16 %v486
        %v935 = vunpack.c.l.b16 %v487
        %v936 = vunpack.c.l.b16 %v488
        %v937 = vunpack.c.l.b16 %v489
        %v938 = vunpack.c.l.b16 %v490
        %v939 = vunpack.c.l.b16 %v491
        %v940 = vunpack.c.l.b16 %v492
        %v941 = vunpack.c.l.b16 %v493
        %v942 = vunpack.c.l.b16 %v494
        %v943 = vunpack.c.l.b16 %v495
        %v944 = vunpack.c.l.b16 %v496
        %v945 = vunpack.c.l.b16 %v497
        %v946 = vunpack.c.l.b16 %v498
        %v947 = vunpack.c.l.b16 %v499
        %v948 = vunpack.c.l.b16 %v500
        %v949 = vunpack.c.l.b16 %v501
        %v950 = vunpack.c.l.b16 %v502
        %v951 = vunpack.c.l.b16 %v503
        %v952 = vunpack.c.l.b16 %v504
        %v953 = vunpack.c.l.b16 %v505
        %v954 = vunpack.c.l.b16 %v506
        %v955 = vunpack.c.l.b16 %v507
        %v956 = vunpack.c.l.b16 %v508
        %v957 = vunpack.c.l.b16 %v509
        %v958 = vunpack.c.l.b16 %v510
        %v959 = vunpack.c.l.b16 %v511
        %v960 = vunpack.c.l.b16 %v512
        %v961 = vunpack.c.l.b16 %v513
        %v962 = vunpack.c.l.b16 %v514
        %v963 = vunpack.c.l.b16 %v515
        %v964 = vunpack.c.l.b16 %v516
        %v965 = vunpack.c.l.b16 %v517
        %v966 = vunpack.c.l.b16 %v518
        %v967 = vunpack.c.l.b16 %v519
        %v968 = vunpack.c.l.b16 %v520
        %v969 = vunpack.c.l.b16 %v521
        %v970 = vunpack.c.l.b16 %v522
        %v971 = vunpack.c.l.b16 %v523
        %v972 = vunpack.c.l.b16 %v524
        %v973 = vunpack.c.l.b16 %v525
        %v974 = vpack.c.b16 %v911, %v910
        %v975 = vpack.c.b16 %v913, %v912
        %v976 = vpack.c.b16 %v915, %v914
        %v977 = vpack.c.b16 %v917, %v916
        %v978 = vpack.c.b16 %v919, %v918
        %v979 = vpack.c.b16 %v921, %v920
        %v980 = vpack.c.b16 %v923, %v922
        %v981 = vpack.c.b16 %v925, %v924
        %v982 = vpack.c.b16 %v927, %v926
        %v983 = vpack.c.b16 %v929, %v928
        %v984 = vpack.c.b16 %v931, %v930
        %v985 = vpack.c.b16 %v933, %v932
        %v986 = vpack.c.b16 %v935, %v934
        %v987 = vpack.c.b16 %v937, %v936
        %v988 = vpack.c.b16 %v939, %v938
        %v989 = vpack.c.b16 %v941, %v940
        %v990 = vpack.c.b16 %v943, %v942
        %v991 = vpack.c.b16 %v945, %v944
        %v992 = vpack.c.b16 %v947, %v946
        %v993 = vpack.c.b16 %v949, %v948
        %v994 = vpack.c.b16 %v951, %v950
        %v995 = vpack.c.b16 %v953, %v952
        %v996 = vpack.c.b16 %v955, %v954
        %v997 = vpack.c.b16 %v957, %v956
        %v998 = vpack.c.b16 %v959, %v958
        %v999 = vpack.c.b16 %v961, %v960
        %v1000 = vpack.c.b16 %v963, %v962
        %v1001 = vpack.c.b16 %v965, %v964
        %v1002 = vpack.c.b16 %v967, %v966
        %v1003 = vpack.c.b16 %v969, %v968
        %v1004 = vpack.c.b16 %v971, %v970
        %v1005 = vpack.c.b16 %v973, %v972
        %1038 = vmatprep.subr.bf16.mxu0 0
        %1039 = vmatpush1.bf16.msra.mxu0 %v981
        %1040 = vmatprep.subr.bf16.mxu0 0
        %1041 = vmatpush1.bf16.msra.mxu0 %v980
        %1042 = vmatprep.subr.bf16.mxu0 0
        %1043 = vmatpush1.bf16.msra.mxu0 %v979
        %1044 = vmatprep.subr.bf16.mxu0 0
        %1045 = vmatpush1.bf16.msra.mxu0 %v978
        %1046 = vmatprep.subr.bf16.mxu0 0
        %1047 = vmatpush1.bf16.msra.mxu0 %v977
        %1048 = vmatprep.subr.bf16.mxu0 0
        %1049 = vmatpush1.bf16.msra.mxu0 %v976
        %1050 = vmatprep.subr.bf16.mxu0 0
        %1051 = vmatpush1.bf16.msra.mxu0 %v975
        %1052 = vmatprep.subr.bf16.mxu0 0
        %1053 = vmatpush1.bf16.msra.mxu0 %v974
        %1054 = vmatprep.subr.bf16.mxu0 0
        %1055 = vmatpush2.bf16.msra.mxu0 %v989
        %1056 = vmatprep.subr.bf16.mxu0 0
        %1057 = vmatpush2.bf16.msra.mxu0 %v988
        %1058 = vmatprep.subr.bf16.mxu0 0
        %1059 = vmatpush2.bf16.msra.mxu0 %v987
        %1060 = vmatprep.subr.bf16.mxu0 0
        %1061 = vmatpush2.bf16.msra.mxu0 %v986
        %1062 = vmatprep.subr.bf16.mxu0 0
        %1063 = vmatpush2.bf16.msra.mxu0 %v985
        %1064 = vmatprep.subr.bf16.mxu0 0
        %1065 = vmatpush2.bf16.msra.mxu0 %v984
        %1066 = vmatprep.subr.bf16.mxu0 0
        %1067 = vmatpush2.bf16.msra.mxu0 %v983
        %1068 = vmatprep.subr.bf16.mxu0 0
        %1069 = vmatpush2.bf16.msra.mxu0 %v982
        %1070 = vmatprep.mubr.bf16.mxu0 %v719
        %1071 = vmatmul.mubr.bf16.gmra.mxu0 %v718
        %v1072 = vpop.f32.mrf.mxu0
        %v1073 = vadd.f32 0.0, %v1072
        %v1074 = vpop.f32.mrf.mxu0
        %v1075 = vpop.f32.mrf.mxu0
        %v1076 = vadd.f32 0.0, %v1075
        %v1077 = vpop.f32.mrf.mxu0
        %1078 = vmatprep.mubr.bf16.mxu0 %v723
        %1079 = vmatmul.mubr.bf16.gmra.mxu0 %v722
        %v1080 = vpop.f32.mrf.mxu0
        %v1081 = vadd.f32 0.0, %v1080
        %v1082 = vpop.f32.mrf.mxu0
        %v1083 = vpop.f32.mrf.mxu0
        %v1084 = vadd.f32 0.0, %v1083
        %v1085 = vpop.f32.mrf.mxu0
        %1086 = vmatprep.mubr.bf16.mxu0 %v727
        %1087 = vmatmul.mubr.bf16.gmra.mxu0 %v726
        %v1088 = vpop.f32.mrf.mxu0
        %v1089 = vadd.f32 0.0, %v1088
        %v1090 = vpop.f32.mrf.mxu0
        %v1091 = vpop.f32.mrf.mxu0
        %v1092 = vadd.f32 0.0, %v1091
        %v1093 = vpop.f32.mrf.mxu0
        %1094 = vmatprep.mubr.bf16.mxu0 %v731
        %1095 = vmatmul.mubr.bf16.gmra.mxu0 %v730
        %v1096 = vpop.f32.mrf.mxu0
        %v1097 = vadd.f32 0.0, %v1096
        %v1098 = vpop.f32.mrf.mxu0
        %v1099 = vpop.f32.mrf.mxu0
        %v1100 = vadd.f32 0.0, %v1099
        %v1101 = vpop.f32.mrf.mxu0
        %1102 = vmatprep.mubr.bf16.mxu0 %v735
        %1103 = vmatmul.mubr.bf16.gmra.mxu0 %v734
        %v1104 = vpop.f32.mrf.mxu0
        %v1105 = vadd.f32 0.0, %v1104
        %v1106 = vpop.f32.mrf.mxu0
        %v1107 = vpop.f32.mrf.mxu0
        %v1108 = vadd.f32 0.0, %v1107
        %v1109 = vpop.f32.mrf.mxu0
        %1110 = vmatprep.mubr.bf16.mxu0 %v739
        %1111 = vmatmul.mubr.bf16.gmra.mxu0 %v738
        %v1112 = vpop.f32.mrf.mxu0
        %v1113 = vadd.f32 0.0, %v1112
        %v1114 = vpop.f32.mrf.mxu0
        %v1115 = vpop.f32.mrf.mxu0
        %v1116 = vadd.f32 0.0, %v1115
        %v1117 = vpop.f32.mrf.mxu0
        %1118 = vmatprep.mubr.bf16.mxu0 %v743
        %1119 = vmatmul.mubr.bf16.gmra.mxu0 %v742
        %v1120 = vpop.f32.mrf.mxu0
        %v1121 = vadd.f32 0.0, %v1120
        %v1122 = vpop.f32.mrf.mxu0
        %v1123 = vpop.f32.mrf.mxu0
        %v1124 = vadd.f32 0.0, %v1123
        %v1125 = vpop.f32.mrf.mxu0
        %1126 = vmatprep.mubr.bf16.mxu0 %v747
        %1127 = vmatmul.mubr.bf16.gmra.mxu0 %v746
        %v1128 = vpop.f32.mrf.mxu0
        %v1129 = vadd.f32 0.0, %v1128
        %v1130 = vpop.f32.mrf.mxu0
        %v1131 = vpop.f32.mrf.mxu0
        %v1132 = vadd.f32 0.0, %v1131
        %v1133 = vpop.f32.mrf.mxu0
        %1134 = vmatprep.mubr.bf16.mxu0 %v751
        %1135 = vmatmul.mubr.bf16.gmra.mxu0 %v750
        %v1136 = vpop.f32.mrf.mxu0
        %v1137 = vadd.f32 0.0, %v1136
        %v1138 = vpop.f32.mrf.mxu0
        %v1139 = vpop.f32.mrf.mxu0
        %v1140 = vadd.f32 0.0, %v1139
        %v1141 = vpop.f32.mrf.mxu0
        %1142 = vmatprep.mubr.bf16.mxu0 %v755
        %1143 = vmatmul.mubr.bf16.gmra.mxu0 %v754
        %v1144 = vpop.f32.mrf.mxu0
        %v1145 = vadd.f32 0.0, %v1144
        %v1146 = vpop.f32.mrf.mxu0
        %v1147 = vpop.f32.mrf.mxu0
        %v1148 = vadd.f32 0.0, %v1147
        %v1149 = vpop.f32.mrf.mxu0
        %1150 = vmatprep.mubr.bf16.mxu0 %v759
        %1151 = vmatmul.mubr.bf16.gmra.mxu0 %v758
        %v1152 = vpop.f32.mrf.mxu0
        %v1153 = vadd.f32 0.0, %v1152
        %v1154 = vpop.f32.mrf.mxu0
        %v1155 = vpop.f32.mrf.mxu0
        %v1156 = vadd.f32 0.0, %v1155
        %v1157 = vpop.f32.mrf.mxu0
        %1158 = vmatprep.mubr.bf16.mxu0 %v763
        %1159 = vmatmul.mubr.bf16.gmra.mxu0 %v762
        %v1160 = vpop.f32.mrf.mxu0
        %v1161 = vadd.f32 0.0, %v1160
        %v1162 = vpop.f32.mrf.mxu0
        %v1163 = vpop.f32.mrf.mxu0
        %v1164 = vadd.f32 0.0, %v1163
        %v1165 = vpop.f32.mrf.mxu0
        %1166 = vmatprep.mubr.bf16.mxu0 %v767
        %1167 = vmatmul.mubr.bf16.gmra.mxu0 %v766
        %v1168 = vpop.f32.mrf.mxu0
        %v1169 = vadd.f32 0.0, %v1168
        %v1170 = vpop.f32.mrf.mxu0
        %v1171 = vpop.f32.mrf.mxu0
        %v1172 = vadd.f32 0.0, %v1171
        %v1173 = vpop.f32.mrf.mxu0
        %1174 = vmatprep.mubr.bf16.mxu0 %v771
        %1175 = vmatmul.mubr.bf16.gmra.mxu0 %v770
        %v1176 = vpop.f32.mrf.mxu0
        %v1177 = vadd.f32 0.0, %v1176
        %v1178 = vpop.f32.mrf.mxu0
        %v1179 = vpop.f32.mrf.mxu0
        %v1180 = vadd.f32 0.0, %v1179
        %v1181 = vpop.f32.mrf.mxu0
        %1182 = vmatprep.mubr.bf16.mxu0 %v775
        %1183 = vmatmul.mubr.bf16.gmra.mxu0 %v774
        %v1184 = vpop.f32.mrf.mxu0
        %v1185 = vadd.f32 0.0, %v1184
        %v1186 = vpop.f32.mrf.mxu0
        %v1187 = vpop.f32.mrf.mxu0
        %v1188 = vadd.f32 0.0, %v1187
        %v1189 = vpop.f32.mrf.mxu0
        %1190 = vmatprep.mubr.bf16.mxu0 %v779
        %1191 = vmatmul.mubr.bf16.gmra.mxu0 %v778
        %v1192 = vpop.f32.mrf.mxu0
        %v1193 = vadd.f32 0.0, %v1192
        %v1194 = vpop.f32.mrf.mxu0
        %v1195 = vpop.f32.mrf.mxu0
        %v1196 = vadd.f32 0.0, %v1195
        %v1197 = vpop.f32.mrf.mxu0
        %1198 = vdwg.mxu0
        %1199 = vmatprep.subr.bf16.mxu0 0
        %1200 = vmatpush1.bf16.msra.mxu0 %v997
        %1201 = vmatprep.subr.bf16.mxu0 0
        %1202 = vmatpush1.bf16.msra.mxu0 %v996
        %1203 = vmatprep.subr.bf16.mxu0 0
        %1204 = vmatpush1.bf16.msra.mxu0 %v995
        %1205 = vmatprep.subr.bf16.mxu0 0
        %1206 = vmatpush1.bf16.msra.mxu0 %v994
        %1207 = vmatprep.subr.bf16.mxu0 0
        %1208 = vmatpush1.bf16.msra.mxu0 %v993
        %1209 = vmatprep.subr.bf16.mxu0 0
        %1210 = vmatpush1.bf16.msra.mxu0 %v992
        %1211 = vmatprep.subr.bf16.mxu0 0
        %1212 = vmatpush1.bf16.msra.mxu0 %v991
        %1213 = vmatprep.subr.bf16.mxu0 0
        %1214 = vmatpush1.bf16.msra.mxu0 %v990
        %1215 = vmatprep.subr.bf16.mxu0 0
        %1216 = vmatpush2.bf16.msra.mxu0 %v1005
        %1217 = vmatprep.subr.bf16.mxu0 0
        %1218 = vmatpush2.bf16.msra.mxu0 %v1004
        %1219 = vmatprep.subr.bf16.mxu0 0
        %1220 = vmatpush2.bf16.msra.mxu0 %v1003
        %1221 = vmatprep.subr.bf16.mxu0 0
        %1222 = vmatpush2.bf16.msra.mxu0 %v1002
        %1223 = vmatprep.subr.bf16.mxu0 0
        %1224 = vmatpush2.bf16.msra.mxu0 %v1001
        %1225 = vmatprep.subr.bf16.mxu0 0
        %1226 = vmatpush2.bf16.msra.mxu0 %v1000
        %1227 = vmatprep.subr.bf16.mxu0 0
        %1228 = vmatpush2.bf16.msra.mxu0 %v999
        %1229 = vmatprep.subr.bf16.mxu0 0
        %1230 = vmatpush2.bf16.msra.mxu0 %v998
        %1231 = vmatprep.mubr.bf16.mxu0 %v721
        %1232 = vmatmul.mubr.bf16.gmra.mxu0 %v720
        %v1233 = vpop.f32.mrf.mxu0
        %v1234 = vadd.f32 %v1073, %v1233
        %v1235 = vpop.f32.mrf.mxu0
        %v1236 = vpop.f32.mrf.mxu0
        %v1237 = vadd.f32 %v1076, %v1236
        %v1238 = vpop.f32.mrf.mxu0
        %1239 = vmatprep.mubr.bf16.mxu0 %v725
        %1240 = vmatmul.mubr.bf16.gmra.mxu0 %v724
        %v1241 = vpop.f32.mrf.mxu0
        %v1242 = vadd.f32 %v1081, %v1241
        %v1243 = vpop.f32.mrf.mxu0
        %v1244 = vpop.f32.mrf.mxu0
        %v1245 = vadd.f32 %v1084, %v1244
        %v1246 = vpop.f32.mrf.mxu0
        %1247 = vmatprep.mubr.bf16.mxu0 %v729
        %1248 = vmatmul.mubr.bf16.gmra.mxu0 %v728
        %v1249 = vpop.f32.mrf.mxu0
        %v1250 = vadd.f32 %v1089, %v1249
        %v1251 = vpop.f32.mrf.mxu0
        %v1252 = vpop.f32.mrf.mxu0
        %v1253 = vadd.f32 %v1092, %v1252
        %v1254 = vpop.f32.mrf.mxu0
        %1255 = vmatprep.mubr.bf16.mxu0 %v733
        %1256 = vmatmul.mubr.bf16.gmra.mxu0 %v732
        %v1257 = vpop.f32.mrf.mxu0
        %v1258 = vadd.f32 %v1097, %v1257
        %v1259 = vpop.f32.mrf.mxu0
        %v1260 = vpop.f32.mrf.mxu0
        %v1261 = vadd.f32 %v1100, %v1260
        %v1262 = vpop.f32.mrf.mxu0
        %1263 = vmatprep.mubr.bf16.mxu0 %v737
        %1264 = vmatmul.mubr.bf16.gmra.mxu0 %v736
        %v1265 = vpop.f32.mrf.mxu0
        %v1266 = vadd.f32 %v1105, %v1265
        %v1267 = vpop.f32.mrf.mxu0
        %v1268 = vpop.f32.mrf.mxu0
        %v1269 = vadd.f32 %v1108, %v1268
        %v1270 = vpop.f32.mrf.mxu0
        %1271 = vmatprep.mubr.bf16.mxu0 %v741
        %1272 = vmatmul.mubr.bf16.gmra.mxu0 %v740
        %v1273 = vpop.f32.mrf.mxu0
        %v1274 = vadd.f32 %v1113, %v1273
        %v1275 = vpop.f32.mrf.mxu0
        %v1276 = vpop.f32.mrf.mxu0
        %v1277 = vadd.f32 %v1116, %v1276
        %v1278 = vpop.f32.mrf.mxu0
        %1279 = vmatprep.mubr.bf16.mxu0 %v745
        %1280 = vmatmul.mubr.bf16.gmra.mxu0 %v744
        %v1281 = vpop.f32.mrf.mxu0
        %v1282 = vadd.f32 %v1121, %v1281
        %v1283 = vpop.f32.mrf.mxu0
        %v1284 = vpop.f32.mrf.mxu0
        %v1285 = vadd.f32 %v1124, %v1284
        %v1286 = vpop.f32.mrf.mxu0
        %1287 = vmatprep.mubr.bf16.mxu0 %v749
        %1288 = vmatmul.mubr.bf16.gmra.mxu0 %v748
        %v1289 = vpop.f32.mrf.mxu0
        %v1290 = vadd.f32 %v1129, %v1289
        %v1291 = vpop.f32.mrf.mxu0
        %v1292 = vpop.f32.mrf.mxu0
        %v1293 = vadd.f32 %v1132, %v1292
        %v1294 = vpop.f32.mrf.mxu0
        %1295 = vmatprep.mubr.bf16.mxu0 %v753
        %1296 = vmatmul.mubr.bf16.gmra.mxu0 %v752
        %v1297 = vpop.f32.mrf.mxu0
        %v1298 = vadd.f32 %v1137, %v1297
        %v1299 = vpop.f32.mrf.mxu0
        %v1300 = vpop.f32.mrf.mxu0
        %v1301 = vadd.f32 %v1140, %v1300
        %v1302 = vpop.f32.mrf.mxu0
        %1303 = vmatprep.mubr.bf16.mxu0 %v757
        %1304 = vmatmul.mubr.bf16.gmra.mxu0 %v756
        %v1305 = vpop.f32.mrf.mxu0
        %v1306 = vadd.f32 %v1145, %v1305
        %v1307 = vpop.f32.mrf.mxu0
        %v1308 = vpop.f32.mrf.mxu0
        %v1309 = vadd.f32 %v1148, %v1308
        %v1310 = vpop.f32.mrf.mxu0
        %1311 = vmatprep.mubr.bf16.mxu0 %v761
        %1312 = vmatmul.mubr.bf16.gmra.mxu0 %v760
        %v1313 = vpop.f32.mrf.mxu0
        %v1314 = vadd.f32 %v1153, %v1313
        %v1315 = vpop.f32.mrf.mxu0
        %v1316 = vpop.f32.mrf.mxu0
        %v1317 = vadd.f32 %v1156, %v1316
        %v1318 = vpop.f32.mrf.mxu0
        %1319 = vmatprep.mubr.bf16.mxu0 %v765
        %1320 = vmatmul.mubr.bf16.gmra.mxu0 %v764
        %v1321 = vpop.f32.mrf.mxu0
        %v1322 = vadd.f32 %v1161, %v1321
        %v1323 = vpop.f32.mrf.mxu0
        %v1324 = vpop.f32.mrf.mxu0
        %v1325 = vadd.f32 %v1164, %v1324
        %v1326 = vpop.f32.mrf.mxu0
        %1327 = vmatprep.mubr.bf16.mxu0 %v769
        %1328 = vmatmul.mubr.bf16.gmra.mxu0 %v768
        %v1329 = vpop.f32.mrf.mxu0
        %v1330 = vadd.f32 %v1169, %v1329
        %v1331 = vpop.f32.mrf.mxu0
        %v1332 = vpop.f32.mrf.mxu0
        %v1333 = vadd.f32 %v1172, %v1332
        %v1334 = vpop.f32.mrf.mxu0
        %1335 = vmatprep.mubr.bf16.mxu0 %v773
        %1336 = vmatmul.mubr.bf16.gmra.mxu0 %v772
        %v1337 = vpop.f32.mrf.mxu0
        %v1338 = vadd.f32 %v1177, %v1337
        %v1339 = vpop.f32.mrf.mxu0
        %v1340 = vpop.f32.mrf.mxu0
        %v1341 = vadd.f32 %v1180, %v1340
        %v1342 = vpop.f32.mrf.mxu0
        %1343 = vmatprep.mubr.bf16.mxu0 %v777
        %1344 = vmatmul.mubr.bf16.gmra.mxu0 %v776
        %v1345 = vpop.f32.mrf.mxu0
        %v1346 = vadd.f32 %v1185, %v1345
        %v1347 = vpop.f32.mrf.mxu0
        %v1348 = vpop.f32.mrf.mxu0
        %v1349 = vadd.f32 %v1188, %v1348
        %v1350 = vpop.f32.mrf.mxu0
        %1351 = vmatprep.mubr.bf16.mxu0 %v781
        %1352 = vmatmul.mubr.bf16.gmra.mxu0 %v780
        %v1353 = vpop.f32.mrf.mxu0
        %v1354 = vadd.f32 %v1193, %v1353
        %v1355 = vpop.f32.mrf.mxu0
        %v1356 = vpop.f32.mrf.mxu0
        %v1357 = vadd.f32 %v1196, %v1356
        %v1358 = vpop.f32.mrf.mxu0
        %1359 = vdwg.mxu0
        %v1360 = vadd.f32 %v366, %v1234
        %v1361 = vadd.f32 %v367, %v1237
        %v1362 = vadd.f32 %v368, %v1242
        %v1363 = vadd.f32 %v369, %v1245
        %v1364 = vadd.f32 %v370, %v1250
        %v1365 = vadd.f32 %v371, %v1253
        %v1366 = vadd.f32 %v372, %v1258
        %v1367 = vadd.f32 %v373, %v1261
        %v1368 = vadd.f32 %v374, %v1266
        %v1369 = vadd.f32 %v375, %v1269
        %v1370 = vadd.f32 %v376, %v1274
        %v1371 = vadd.f32 %v377, %v1277
        %v1372 = vadd.f32 %v378, %v1282
        %v1373 = vadd.f32 %v379, %v1285
        %v1374 = vadd.f32 %v380, %v1290
        %v1375 = vadd.f32 %v381, %v1293
        %v1376 = vadd.f32 %v382, %v1298
        %v1377 = vadd.f32 %v383, %v1301
        %v1378 = vadd.f32 %v384, %v1306
        %v1379 = vadd.f32 %v385, %v1309
        %v1380 = vadd.f32 %v386, %v1314
        %v1381 = vadd.f32 %v387, %v1317
        %v1382 = vadd.f32 %v388, %v1322
        %v1383 = vadd.f32 %v389, %v1325
        %v1384 = vadd.f32 %v390, %v1330
        %v1385 = vadd.f32 %v391, %v1333
        %v1386 = vadd.f32 %v392, %v1338
        %v1387 = vadd.f32 %v393, %v1341
        %v1388 = vadd.f32 %v394, %v1346
        %v1389 = vadd.f32 %v395, %v1349
        %v1390 = vadd.f32 %v396, %v1354
        %v1391 = vadd.f32 %v397, %v1357
        %vm1392 = vcmask 31744
        %1393 = vst.msk [vmem:[#allocation2] sm:$0xff] %vm1392, %v1360
        %1394 = vst.msk [vmem:[#allocation2 + $0x8] sm:$0xff] %vm1392, %v1361
        %1395 = vst.msk [vmem:[#allocation2 + $0x10] sm:$0xff] %vm1392, %v1362
        %1396 = vst.msk [vmem:[#allocation2 + $0x18] sm:$0xff] %vm1392, %v1363
        %1397 = vst.msk [vmem:[#allocation2 + $0x20] sm:$0xff] %vm1392, %v1364
        %1398 = vst.msk [vmem:[#allocation2 + $0x28] sm:$0xff] %vm1392, %v1365
        %1399 = vst.msk [vmem:[#allocation2 + $0x30] sm:$0xff] %vm1392, %v1366
        %1400 = vst.msk [vmem:[#allocation2 + $0x38] sm:$0xff] %vm1392, %v1367
        %1401 = vst.msk [vmem:[#allocation2 + $0x40] sm:$0xff] %vm1392, %v1368
        %1402 = vst.msk [vmem:[#allocation2 + $0x48] sm:$0xff] %vm1392, %v1369
        %1403 = vst.msk [vmem:[#allocation2 + $0x50] sm:$0xff] %vm1392, %v1370
        %1404 = vst.msk [vmem:[#allocation2 + $0x58] sm:$0xff] %vm1392, %v1371
        %1405 = vst.msk [vmem:[#allocation2 + $0x60] sm:$0xff] %vm1392, %v1372
        %1406 = vst.msk [vmem:[#allocation2 + $0x68] sm:$0xff] %vm1392, %v1373
        %1407 = vst.msk [vmem:[#allocation2 + $0x70] sm:$0xff] %vm1392, %v1374
        %1408 = vst.msk [vmem:[#allocation2 + $0x78] sm:$0xff] %vm1392, %v1375
        %1409 = vst.msk [vmem:[#allocation2 + $0x80] sm:$0xff] %vm1392, %v1376
        %1410 = vst.msk [vmem:[#allocation2 + $0x88] sm:$0xff] %vm1392, %v1377
        %1411 = vst.msk [vmem:[#allocation2 + $0x90] sm:$0xff] %vm1392, %v1378
        %1412 = vst.msk [vmem:[#allocation2 + $0x98] sm:$0xff] %vm1392, %v1379
        %1413 = vst.msk [vmem:[#allocation2 + $0xa0] sm:$0xff] %vm1392, %v1380
        %1414 = vst.msk [vmem:[#allocation2 + $0xa8] sm:$0xff] %vm1392, %v1381
        %1415 = vst.msk [vmem:[#allocation2 + $0xb0] sm:$0xff] %vm1392, %v1382
        %1416 = vst.msk [vmem:[#allocation2 + $0xb8] sm:$0xff] %vm1392, %v1383
        %1417 = vst.msk [vmem:[#allocation2 + $0xc0] sm:$0xff] %vm1392, %v1384
        %1418 = vst.msk [vmem:[#allocation2 + $0xc8] sm:$0xff] %vm1392, %v1385
        %1419 = vst.msk [vmem:[#allocation2 + $0xd0] sm:$0xff] %vm1392, %v1386
        %1420 = vst.msk [vmem:[#allocation2 + $0xd8] sm:$0xff] %vm1392, %v1387
        %1421 = vst.msk [vmem:[#allocation2 + $0xe0] sm:$0xff] %vm1392, %v1388
        %1422 = vst.msk [vmem:[#allocation2 + $0xe8] sm:$0xff] %vm1392, %v1389
        %1423 = vst.msk [vmem:[#allocation2 + $0xf0] sm:$0xff] %vm1392, %v1390
        %1424 = vst.msk [vmem:[#allocation2 + $0xf8] sm:$0xff] %vm1392, %v1391
        // Predicated region
        $region45: #{tpu_custom_call.1} parent=35 // pred_check
          %p1425 = pneg %p329
        $region46: #{tpu_custom_call.1} parent=35 // pred_check_branch
          %1427 = sbr.rel (%p1425) target = $region48
        $region47: #{tpu_custom_call.1} parent=35 // pred_region
          %v1428 = vld [vmem:[#allocation2] sm:$0xff]
          %v1429 = vld [vmem:[#allocation2 + $0x8] sm:$0xff]
          %v1430 = vld [vmem:[#allocation2 + $0x10] sm:$0xff]
          %v1431 = vld [vmem:[#allocation2 + $0x18] sm:$0xff]
          %v1432 = vld [vmem:[#allocation2 + $0x20] sm:$0xff]
          %v1433 = vld [vmem:[#allocation2 + $0x28] sm:$0xff]
          %v1434 = vld [vmem:[#allocation2 + $0x30] sm:$0xff]
          %v1435 = vld [vmem:[#allocation2 + $0x38] sm:$0xff]
          %v1436 = vld [vmem:[#allocation2 + $0x40] sm:$0xff]
          %v1437 = vld [vmem:[#allocation2 + $0x48] sm:$0xff]
          %v1438 = vld [vmem:[#allocation2 + $0x50] sm:$0xff]
          %v1439 = vld [vmem:[#allocation2 + $0x58] sm:$0xff]
          %v1440 = vld [vmem:[#allocation2 + $0x60] sm:$0xff]
          %v1441 = vld [vmem:[#allocation2 + $0x68] sm:$0xff]
          %v1442 = vld [vmem:[#allocation2 + $0x70] sm:$0xff]
          %v1443 = vld [vmem:[#allocation2 + $0x78] sm:$0xff]
          %v1444 = vld [vmem:[#allocation2 + $0x80] sm:$0xff]
          %v1445 = vld [vmem:[#allocation2 + $0x88] sm:$0xff]
          %v1446 = vld [vmem:[#allocation2 + $0x90] sm:$0xff]
          %v1447 = vld [vmem:[#allocation2 + $0x98] sm:$0xff]
          %v1448 = vld [vmem:[#allocation2 + $0xa0] sm:$0xff]
          %v1449 = vld [vmem:[#allocation2 + $0xa8] sm:$0xff]
          %v1450 = vld [vmem:[#allocation2 + $0xb0] sm:$0xff]
          %v1451 = vld [vmem:[#allocation2 + $0xb8] sm:$0xff]
          %v1452 = vld [vmem:[#allocation2 + $0xc0] sm:$0xff]
          %v1453 = vld [vmem:[#allocation2 + $0xc8] sm:$0xff]
          %v1454 = vld [vmem:[#allocation2 + $0xd0] sm:$0xff]
          %v1455 = vld [vmem:[#allocation2 + $0xd8] sm:$0xff]
          %v1456 = vld [vmem:[#allocation2 + $0xe0] sm:$0xff]
          %v1457 = vld [vmem:[#allocation2 + $0xe8] sm:$0xff]
          %v1458 = vld [vmem:[#allocation2 + $0xf0] sm:$0xff]
          %v1459 = vld [vmem:[#allocation2 + $0xf8] sm:$0xff]
          %v1460 = vld [vmem:[%s2] sm:$0xf]
          %v1461 = vld [vmem:[%s3] sm:$0x1]
          %v1463 = vlaneseq
          %v1464 = vshrl.u32 %v1463, 7
          %v1465 = vsub.s32 0, %v1464
          %v1466 = vrot.slane %v1461, %v1465
          %v1469 = vsel %vm1392, %v1428, 0
          %v1472 = vsel %vm1392, %v1429, 0
          %v1475 = vsel %vm1392, %v1430, 0
          %v1478 = vsel %vm1392, %v1431, 0
          %v1481 = vsel %vm1392, %v1432, 0
          %v1484 = vsel %vm1392, %v1433, 0
          %v1487 = vsel %vm1392, %v1434, 0
          %v1490 = vsel %vm1392, %v1435, 0
          %v1493 = vsel %vm1392, %v1436, 0
          %v1496 = vsel %vm1392, %v1437, 0
          %v1499 = vsel %vm1392, %v1438, 0
          %v1502 = vsel %vm1392, %v1439, 0
          %v1505 = vsel %vm1392, %v1440, 0
          %v1508 = vsel %vm1392, %v1441, 0
          %v1511 = vsel %vm1392, %v1442, 0
          %v1514 = vsel %vm1392, %v1443, 0
          %v1517 = vsel %vm1392, %v1444, 0
          %v1520 = vsel %vm1392, %v1445, 0
          %v1523 = vsel %vm1392, %v1446, 0
          %v1526 = vsel %vm1392, %v1447, 0
          %v1529 = vsel %vm1392, %v1448, 0
          %v1532 = vsel %vm1392, %v1449, 0
          %v1535 = vsel %vm1392, %v1450, 0
          %v1538 = vsel %vm1392, %v1451, 0
          %v1541 = vsel %vm1392, %v1452, 0
          %v1544 = vsel %vm1392, %v1453, 0
          %v1547 = vsel %vm1392, %v1454, 0
          %v1550 = vsel %vm1392, %v1455, 0
          %v1553 = vsel %vm1392, %v1456, 0
          %v1556 = vsel %vm1392, %v1457, 0
          %v1559 = vsel %vm1392, %v1458, 0
          %v1562 = vsel %vm1392, %v1459, 0
          %vm1564 = vcmask 1043456
          %v1566 = vsel %vm1564, %v1460, 0
          %1568 = vmatprep.subr.mxu0 0.0
          %1569 = vmatpush1.msra.mxu0 0.0
          %1570 = vmatprep.subr.mxu0 0.0
          %1571 = vmatpush1.msra.mxu0 0.0
          %1572 = vmatprep.subr.mxu0 0.0
          %1573 = vmatpush1.msra.mxu0 0.0
          %1574 = vmatprep.subr.mxu0 0.0
          %1575 = vmatpush1.msra.mxu0 0.0
          %1576 = vmatprep.subr.mxu0 0.0
          %1577 = vmatpush1.msra.mxu0 0.0
          %1578 = vmatprep.subr.mxu0 0.0
          %1579 = vmatpush1.msra.mxu0 0.0
          %1580 = vmatprep.subr.mxu0 0.0
          %1581 = vmatpush1.msra.mxu0 0.0
          %1582 = vmatprep.subr.mxu0 0.0
          %1583 = vmatpush1.msra.mxu0 0.0
          %1584 = vmatprep.subr.mxu0 0.0
          %1585 = vmatpush1.msra.mxu0 0.0
          %1586 = vmatprep.subr.mxu0 0.0
          %1587 = vmatpush1.msra.mxu0 0.0
          %1588 = vmatprep.subr.mxu0 0.0
          %1589 = vmatpush1.msra.mxu0 0.0
          %1590 = vmatprep.subr.mxu0 0.0
          %1591 = vmatpush1.msra.mxu0 0.0
          %1592 = vmatprep.subr.mxu0 0.0
          %1593 = vmatpush1.msra.mxu0 0.0
          %1594 = vmatprep.subr.mxu0 0.0
          %1595 = vmatpush1.msra.mxu0 0.0
          %1596 = vmatprep.subr.mxu0 0.0
          %1597 = vmatpush1.msra.mxu0 0.0
          %1598 = vmatprep.subr.mxu0 0.0
          %1599 = vmatpush1.msra.mxu0 %v1566
          %1600 = vmatprep.subr.mxu0 0.0
          %1601 = vmatpush2.msra.mxu0 0.0
          %1602 = vmatprep.subr.mxu0 0.0
          %1603 = vmatpush2.msra.mxu0 0.0
          %1604 = vmatprep.subr.mxu0 0.0
          %1605 = vmatpush2.msra.mxu0 0.0
          %1606 = vmatprep.subr.mxu0 0.0
          %1607 = vmatpush2.msra.mxu0 0.0
          %1608 = vmatprep.subr.mxu0 0.0
          %1609 = vmatpush2.msra.mxu0 0.0
          %1610 = vmatprep.subr.mxu0 0.0
          %1611 = vmatpush2.msra.mxu0 0.0
          %1612 = vmatprep.subr.mxu0 0.0
          %1613 = vmatpush2.msra.mxu0 0.0
          %1614 = vmatprep.subr.mxu0 0.0
          %1615 = vmatpush2.msra.mxu0 0.0
          %1616 = vmatprep.subr.mxu0 0.0
          %1617 = vmatpush2.msra.mxu0 0.0
          %1618 = vmatprep.subr.mxu0 0.0
          %1619 = vmatpush2.msra.mxu0 0.0
          %1620 = vmatprep.subr.mxu0 0.0
          %1621 = vmatpush2.msra.mxu0 0.0
          %1622 = vmatprep.subr.mxu0 0.0
          %1623 = vmatpush2.msra.mxu0 0.0
          %1624 = vmatprep.subr.mxu0 0.0
          %1625 = vmatpush2.msra.mxu0 0.0
          %1626 = vmatprep.subr.mxu0 0.0
          %1627 = vmatpush2.msra.mxu0 0.0
          %1628 = vmatprep.subr.mxu0 0.0
          %1629 = vmatpush2.msra.mxu0 0.0
          %1630 = vmatprep.subr.mxu0 0.0
          %1631 = vmatpush2.msra.mxu0 0.0
          %1632 = vmatprep.mubr.f32.mxu0 0.0
          %1633 = vmatmul.mubr.f32.gmra.mxu0 %v1469
          %v1634 = vpop.f32.mrf.mxu0
          %v1635 = vadd.f32 %v1466, %v1634
          %v1636 = vpop.f32.mrf.mxu0
          %1637 = vmatprep.mubr.f32.mxu0 0.0
          %1638 = vmatmul.mubr.f32.gmra.mxu0 %v1472
          %v1639 = vpop.f32.mrf.mxu0
          %v1640 = vadd.f32 %v1466, %v1639
          %v1641 = vpop.f32.mrf.mxu0
          %1642 = vmatprep.mubr.f32.mxu0 0.0
          %1643 = vmatmul.mubr.f32.gmra.mxu0 %v1475
          %v1644 = vpop.f32.mrf.mxu0
          %v1645 = vadd.f32 %v1466, %v1644
          %v1646 = vpop.f32.mrf.mxu0
          %1647 = vmatprep.mubr.f32.mxu0 0.0
          %1648 = vmatmul.mubr.f32.gmra.mxu0 %v1478
          %v1649 = vpop.f32.mrf.mxu0
          %v1650 = vadd.f32 %v1466, %v1649
          %v1651 = vpop.f32.mrf.mxu0
          %1652 = vmatprep.mubr.f32.mxu0 0.0
          %1653 = vmatmul.mubr.f32.gmra.mxu0 %v1481
          %v1654 = vpop.f32.mrf.mxu0
          %v1655 = vadd.f32 %v1466, %v1654
          %v1656 = vpop.f32.mrf.mxu0
          %1657 = vmatprep.mubr.f32.mxu0 0.0
          %1658 = vmatmul.mubr.f32.gmra.mxu0 %v1484
          %v1659 = vpop.f32.mrf.mxu0
          %v1660 = vadd.f32 %v1466, %v1659
          %v1661 = vpop.f32.mrf.mxu0
          %1662 = vmatprep.mubr.f32.mxu0 0.0
          %1663 = vmatmul.mubr.f32.gmra.mxu0 %v1487
          %v1664 = vpop.f32.mrf.mxu0
          %v1665 = vadd.f32 %v1466, %v1664
          %v1666 = vpop.f32.mrf.mxu0
          %1667 = vmatprep.mubr.f32.mxu0 0.0
          %1668 = vmatmul.mubr.f32.gmra.mxu0 %v1490
          %v1669 = vpop.f32.mrf.mxu0
          %v1670 = vadd.f32 %v1466, %v1669
          %v1671 = vpop.f32.mrf.mxu0
          %1672 = vmatprep.mubr.f32.mxu0 0.0
          %1673 = vmatmul.mubr.f32.gmra.mxu0 %v1493
          %v1674 = vpop.f32.mrf.mxu0
          %v1675 = vadd.f32 %v1466, %v1674
          %v1676 = vpop.f32.mrf.mxu0
          %1677 = vmatprep.mubr.f32.mxu0 0.0
          %1678 = vmatmul.mubr.f32.gmra.mxu0 %v1496
          %v1679 = vpop.f32.mrf.mxu0
          %v1680 = vadd.f32 %v1466, %v1679
          %v1681 = vpop.f32.mrf.mxu0
          %1682 = vmatprep.mubr.f32.mxu0 0.0
          %1683 = vmatmul.mubr.f32.gmra.mxu0 %v1499
          %v1684 = vpop.f32.mrf.mxu0
          %v1685 = vadd.f32 %v1466, %v1684
          %v1686 = vpop.f32.mrf.mxu0
          %1687 = vmatprep.mubr.f32.mxu0 0.0
          %1688 = vmatmul.mubr.f32.gmra.mxu0 %v1502
          %v1689 = vpop.f32.mrf.mxu0
          %v1690 = vadd.f32 %v1466, %v1689
          %v1691 = vpop.f32.mrf.mxu0
          %1692 = vmatprep.mubr.f32.mxu0 0.0
          %1693 = vmatmul.mubr.f32.gmra.mxu0 %v1505
          %v1694 = vpop.f32.mrf.mxu0
          %v1695 = vadd.f32 %v1466, %v1694
          %v1696 = vpop.f32.mrf.mxu0
          %1697 = vmatprep.mubr.f32.mxu0 0.0
          %1698 = vmatmul.mubr.f32.gmra.mxu0 %v1508
          %v1699 = vpop.f32.mrf.mxu0
          %v1700 = vadd.f32 %v1466, %v1699
          %v1701 = vpop.f32.mrf.mxu0
          %1702 = vmatprep.mubr.f32.mxu0 0.0
          %1703 = vmatmul.mubr.f32.gmra.mxu0 %v1511
          %v1704 = vpop.f32.mrf.mxu0
          %v1705 = vadd.f32 %v1466, %v1704
          %v1706 = vpop.f32.mrf.mxu0
          %1707 = vmatprep.mubr.f32.mxu0 0.0
          %1708 = vmatmul.mubr.f32.gmra.mxu0 %v1514
          %v1709 = vpop.f32.mrf.mxu0
          %v1710 = vadd.f32 %v1466, %v1709
          %v1711 = vpop.f32.mrf.mxu0
          %1712 = vmatprep.mubr.f32.mxu0 0.0
          %1713 = vmatmul.mubr.f32.gmra.mxu0 %v1517
          %v1714 = vpop.f32.mrf.mxu0
          %v1715 = vadd.f32 %v1466, %v1714
          %v1716 = vpop.f32.mrf.mxu0
          %1717 = vmatprep.mubr.f32.mxu0 0.0
          %1718 = vmatmul.mubr.f32.gmra.mxu0 %v1520
          %v1719 = vpop.f32.mrf.mxu0
          %v1720 = vadd.f32 %v1466, %v1719
          %v1721 = vpop.f32.mrf.mxu0
          %1722 = vmatprep.mubr.f32.mxu0 0.0
          %1723 = vmatmul.mubr.f32.gmra.mxu0 %v1523
          %v1724 = vpop.f32.mrf.mxu0
          %v1725 = vadd.f32 %v1466, %v1724
          %v1726 = vpop.f32.mrf.mxu0
          %1727 = vmatprep.mubr.f32.mxu0 0.0
          %1728 = vmatmul.mubr.f32.gmra.mxu0 %v1526
          %v1729 = vpop.f32.mrf.mxu0
          %v1730 = vadd.f32 %v1466, %v1729
          %v1731 = vpop.f32.mrf.mxu0
          %1732 = vmatprep.mubr.f32.mxu0 0.0
          %1733 = vmatmul.mubr.f32.gmra.mxu0 %v1529
          %v1734 = vpop.f32.mrf.mxu0
          %v1735 = vadd.f32 %v1466, %v1734
          %v1736 = vpop.f32.mrf.mxu0
          %1737 = vmatprep.mubr.f32.mxu0 0.0
          %1738 = vmatmul.mubr.f32.gmra.mxu0 %v1532
          %v1739 = vpop.f32.mrf.mxu0
          %v1740 = vadd.f32 %v1466, %v1739
          %v1741 = vpop.f32.mrf.mxu0
          %1742 = vmatprep.mubr.f32.mxu0 0.0
          %1743 = vmatmul.mubr.f32.gmra.mxu0 %v1535
          %v1744 = vpop.f32.mrf.mxu0
          %v1745 = vadd.f32 %v1466, %v1744
          %v1746 = vpop.f32.mrf.mxu0
          %1747 = vmatprep.mubr.f32.mxu0 0.0
          %1748 = vmatmul.mubr.f32.gmra.mxu0 %v1538
          %v1749 = vpop.f32.mrf.mxu0
          %v1750 = vadd.f32 %v1466, %v1749
          %v1751 = vpop.f32.mrf.mxu0
          %1752 = vmatprep.mubr.f32.mxu0 0.0
          %1753 = vmatmul.mubr.f32.gmra.mxu0 %v1541
          %v1754 = vpop.f32.mrf.mxu0
          %v1755 = vadd.f32 %v1466, %v1754
          %v1756 = vpop.f32.mrf.mxu0
          %1757 = vmatprep.mubr.f32.mxu0 0.0
          %1758 = vmatmul.mubr.f32.gmra.mxu0 %v1544
          %v1759 = vpop.f32.mrf.mxu0
          %v1760 = vadd.f32 %v1466, %v1759
          %v1761 = vpop.f32.mrf.mxu0
          %1762 = vmatprep.mubr.f32.mxu0 0.0
          %1763 = vmatmul.mubr.f32.gmra.mxu0 %v1547
          %v1764 = vpop.f32.mrf.mxu0
          %v1765 = vadd.f32 %v1466, %v1764
          %v1766 = vpop.f32.mrf.mxu0
          %1767 = vmatprep.mubr.f32.mxu0 0.0
          %1768 = vmatmul.mubr.f32.gmra.mxu0 %v1550
          %v1769 = vpop.f32.mrf.mxu0
          %v1770 = vadd.f32 %v1466, %v1769
          %v1771 = vpop.f32.mrf.mxu0
          %1772 = vmatprep.mubr.f32.mxu0 0.0
          %1773 = vmatmul.mubr.f32.gmra.mxu0 %v1553
          %v1774 = vpop.f32.mrf.mxu0
          %v1775 = vadd.f32 %v1466, %v1774
          %v1776 = vpop.f32.mrf.mxu0
          %1777 = vmatprep.mubr.f32.mxu0 0.0
          %1778 = vmatmul.mubr.f32.gmra.mxu0 %v1556
          %v1779 = vpop.f32.mrf.mxu0
          %v1780 = vadd.f32 %v1466, %v1779
          %v1781 = vpop.f32.mrf.mxu0
          %1782 = vmatprep.mubr.f32.mxu0 0.0
          %1783 = vmatmul.mubr.f32.gmra.mxu0 %v1559
          %v1784 = vpop.f32.mrf.mxu0
          %v1785 = vadd.f32 %v1466, %v1784
          %v1786 = vpop.f32.mrf.mxu0
          %1787 = vmatprep.mubr.f32.mxu0 0.0
          %1788 = vmatmul.mubr.f32.gmra.mxu0 %v1562
          %v1789 = vpop.f32.mrf.mxu0
          %v1790 = vadd.f32 %v1466, %v1789
          %v1791 = vpop.f32.mrf.mxu0
          %1792 = vdwg.mxu0
          %1793 = vst [vmem:[%s306] sm:$0xff] %v1635
          %1794 = vst [vmem:[%s306 + $0x8] sm:$0xff] %v1640
          %1795 = vst [vmem:[%s306 + $0x10] sm:$0xff] %v1645
          %1796 = vst [vmem:[%s306 + $0x18] sm:$0xff] %v1650
          %1797 = vst [vmem:[%s306 + $0x20] sm:$0xff] %v1655
          %1798 = vst [vmem:[%s306 + $0x28] sm:$0xff] %v1660
          %1799 = vst [vmem:[%s306 + $0x30] sm:$0xff] %v1665
          %1800 = vst [vmem:[%s306 + $0x38] sm:$0xff] %v1670
          %1801 = vst [vmem:[%s306 + $0x40] sm:$0xff] %v1675
          %1802 = vst [vmem:[%s306 + $0x48] sm:$0xff] %v1680
          %1803 = vst [vmem:[%s306 + $0x50] sm:$0xff] %v1685
          %1804 = vst [vmem:[%s306 + $0x58] sm:$0xff] %v1690
          %1805 = vst [vmem:[%s306 + $0x60] sm:$0xff] %v1695
          %1806 = vst [vmem:[%s306 + $0x68] sm:$0xff] %v1700
          %1807 = vst [vmem:[%s306 + $0x70] sm:$0xff] %v1705
          %1808 = vst [vmem:[%s306 + $0x78] sm:$0xff] %v1710
          %1809 = vst [vmem:[%s306 + $0x80] sm:$0xff] %v1715
          %1810 = vst [vmem:[%s306 + $0x88] sm:$0xff] %v1720
          %1811 = vst [vmem:[%s306 + $0x90] sm:$0xff] %v1725
          %1812 = vst [vmem:[%s306 + $0x98] sm:$0xff] %v1730
          %1813 = vst [vmem:[%s306 + $0xa0] sm:$0xff] %v1735
          %1814 = vst [vmem:[%s306 + $0xa8] sm:$0xff] %v1740
          %1815 = vst [vmem:[%s306 + $0xb0] sm:$0xff] %v1745
          %1816 = vst [vmem:[%s306 + $0xb8] sm:$0xff] %v1750
          %1817 = vst [vmem:[%s306 + $0xc0] sm:$0xff] %v1755
          %1818 = vst [vmem:[%s306 + $0xc8] sm:$0xff] %v1760
          %1819 = vst [vmem:[%s306 + $0xd0] sm:$0xff] %v1765
          %1820 = vst [vmem:[%s306 + $0xd8] sm:$0xff] %v1770
          %1821 = vst [vmem:[%s306 + $0xe0] sm:$0xff] %v1775
          %1822 = vst [vmem:[%s306 + $0xe8] sm:$0xff] %v1780
          %1823 = vst [vmem:[%s306 + $0xf0] sm:$0xff] %v1785
          %1824 = vst [vmem:[%s306 + $0xf8] sm:$0xff] %v1790
          %v1825 = vadd.f32 %v1635, %v1640
          %v1826 = vadd.f32 %v1825, %v1645
          %v1827 = vadd.f32 %v1826, %v1650
          %v1828 = vadd.f32 %v1827, %v1655
          %v1829 = vadd.f32 %v1828, %v1660
          %v1830 = vadd.f32 %v1829, %v1665
          %v1831 = vadd.f32 %v1830, %v1670
          %v1832 = vadd.f32 %v1831, %v1675
          %v1833 = vadd.f32 %v1832, %v1680
          %v1834 = vadd.f32 %v1833, %v1685
          %v1835 = vadd.f32 %v1834, %v1690
          %v1836 = vadd.f32 %v1835, %v1695
          %v1837 = vadd.f32 %v1836, %v1700
          %v1838 = vadd.f32 %v1837, %v1705
          %v1839 = vadd.f32 %v1838, %v1710
          %v1840 = vadd.f32 %v1839, %v1715
          %v1841 = vadd.f32 %v1840, %v1720
          %v1842 = vadd.f32 %v1841, %v1725
          %v1843 = vadd.f32 %v1842, %v1730
          %v1844 = vadd.f32 %v1843, %v1735
          %v1845 = vadd.f32 %v1844, %v1740
          %v1846 = vadd.f32 %v1845, %v1745
          %v1847 = vadd.f32 %v1846, %v1750
          %v1848 = vadd.f32 %v1847, %v1755
          %v1849 = vadd.f32 %v1848, %v1760
          %v1850 = vadd.f32 %v1849, %v1765
          %v1851 = vadd.f32 %v1850, %v1770
          %v1852 = vadd.f32 %v1851, %v1775
          %v1853 = vadd.f32 %v1852, %v1780
          %v1854 = vadd.f32 %v1853, %v1785
          %v1855 = vadd.f32 %v1854, %v1790
          %v1856 = vrot.slane %v1855, 4
          %v1857 = vadd.f32 %v1855, %v1856
          %v1858 = vrot.slane %v1857, 2
          %v1859 = vadd.f32 %v1857, %v1858
          %v1860 = vrot.slane %v1859, 1
          %v1861 = vadd.f32 %v1859, %v1860
          %1862 = vst [vmem:[%s312] sm:$0x1] %v1861
          %v1863 = vmul.f32 %v1635, %v1635
          %v1864 = vmul.f32 %v1640, %v1640
          %v1865 = vmul.f32 %v1645, %v1645
          %v1866 = vmul.f32 %v1650, %v1650
          %v1867 = vmul.f32 %v1655, %v1655
          %v1868 = vmul.f32 %v1660, %v1660
          %v1869 = vmul.f32 %v1665, %v1665
          %v1870 = vmul.f32 %v1670, %v1670
          %v1871 = vmul.f32 %v1675, %v1675
          %v1872 = vmul.f32 %v1680, %v1680
          %v1873 = vmul.f32 %v1685, %v1685
          %v1874 = vmul.f32 %v1690, %v1690
          %v1875 = vmul.f32 %v1695, %v1695
          %v1876 = vmul.f32 %v1700, %v1700
          %v1877 = vmul.f32 %v1705, %v1705
          %v1878 = vmul.f32 %v1710, %v1710
          %v1879 = vmul.f32 %v1715, %v1715
          %v1880 = vmul.f32 %v1720, %v1720
          %v1881 = vmul.f32 %v1725, %v1725
          %v1882 = vmul.f32 %v1730, %v1730
          %v1883 = vmul.f32 %v1735, %v1735
          %v1884 = vmul.f32 %v1740, %v1740
          %v1885 = vmul.f32 %v1745, %v1745
          %v1886 = vmul.f32 %v1750, %v1750
          %v1887 = vmul.f32 %v1755, %v1755
          %v1888 = vmul.f32 %v1760, %v1760
          %v1889 = vmul.f32 %v1765, %v1765
          %v1890 = vmul.f32 %v1770, %v1770
          %v1891 = vmul.f32 %v1775, %v1775
          %v1892 = vmul.f32 %v1780, %v1780
          %v1893 = vmul.f32 %v1785, %v1785
          %v1894 = vmul.f32 %v1790, %v1790
          %v1895 = vadd.f32 %v1863, %v1864
          %v1896 = vadd.f32 %v1895, %v1865
          %v1897 = vadd.f32 %v1896, %v1866
          %v1898 = vadd.f32 %v1897, %v1867
          %v1899 = vadd.f32 %v1898, %v1868
          %v1900 = vadd.f32 %v1899, %v1869
          %v1901 = vadd.f32 %v1900, %v1870
          %v1902 = vadd.f32 %v1901, %v1871
          %v1903 = vadd.f32 %v1902, %v1872
          %v1904 = vadd.f32 %v1903, %v1873
          %v1905 = vadd.f32 %v1904, %v1874
          %v1906 = vadd.f32 %v1905, %v1875
          %v1907 = vadd.f32 %v1906, %v1876
          %v1908 = vadd.f32 %v1907, %v1877
          %v1909 = vadd.f32 %v1908, %v1878
          %v1910 = vadd.f32 %v1909, %v1879
          %v1911 = vadd.f32 %v1910, %v1880
          %v1912 = vadd.f32 %v1911, %v1881
          %v1913 = vadd.f32 %v1912, %v1882
          %v1914 = vadd.f32 %v1913, %v1883
          %v1915 = vadd.f32 %v1914, %v1884
          %v1916 = vadd.f32 %v1915, %v1885
          %v1917 = vadd.f32 %v1916, %v1886
          %v1918 = vadd.f32 %v1917, %v1887
          %v1919 = vadd.f32 %v1918, %v1888
          %v1920 = vadd.f32 %v1919, %v1889
          %v1921 = vadd.f32 %v1920, %v1890
          %v1922 = vadd.f32 %v1921, %v1891
          %v1923 = vadd.f32 %v1922, %v1892
          %v1924 = vadd.f32 %v1923, %v1893
          %v1925 = vadd.f32 %v1924, %v1894
          %v1926 = vrot.slane %v1925, 4
          %v1927 = vadd.f32 %v1925, %v1926
          %v1928 = vrot.slane %v1927, 2
          %v1929 = vadd.f32 %v1927, %v1928
          %v1930 = vrot.slane %v1929, 1
          %v1931 = vadd.f32 %v1929, %v1930
          %1932 = vst [vmem:[%s318] sm:$0x1] %v1931
        $region48: #{tpu_custom_call.1} parent=35 // pred_fallthru
          _
        %s1933 = sand.u32 %s143, 1
        %s1934 = scalar_lea.sflag [#allocation5], %s1933
        %s1935 = sand.u32 %s143, 1
        %s1936 = smul.addr %s1935, 256
        %s1937 = scalar_lea.vmem [#allocation6], %s1936
        %s1938 = sand.u32 %s27, 1
        %s1939 = scalar_lea.sflag [#allocation8], %s1938
        %s1940 = sand.u32 %s169, 1
        %s1941 = scalar_lea.vmem [#allocation7], %s1940
        %s1942 = sand.u32 %s27, 1
        %s1943 = scalar_lea.sflag [#allocation8], %s1942
        %s1944 = sand.u32 %s195, 1
        %s1945 = scalar_lea.vmem [#allocation9], %s1944
        // Predicated region
        $region49: #{tpu_custom_call.1} parent=35 // pred_check
          %p1946 = pneg %p153
        $region50: #{tpu_custom_call.1} parent=35 // pred_check_branch
          %1948 = sbr.rel (%p1946) target = $region52
        $region51: #{tpu_custom_call.1} parent=35 // pred_region
          %s1949 = smul.u32 32, %s31
          %s1951 = ssub.s32 4096, 4096
          %1952 = vsyncadd %s1934, %s1951
          %s1953 = smul.addr %s1949, 128
          %s1954 = scalar_lea.hbm %s4, %s1953
          %s1955 = sshll.u32 %s1937, 4
          %s1956 = int_to_ptr.vmem [resolvable:$true] %s1955
          %1961 = dma.vmem_to_hbm [thread:$0]  %s1956, 4096, %s1954, %s1934, 128, 128, 8
        $region52: #{tpu_custom_call.1} parent=35 // pred_fallthru
          _
        // Predicated region
        $region53: #{tpu_custom_call.1} parent=35 // pred_check
          %p1962 = pneg %p179
        $region54: #{tpu_custom_call.1} parent=35 // pred_check_branch
          %1964 = sbr.rel (%p1962) target = $region56
        $region55: #{tpu_custom_call.1} parent=35 // pred_region
          %s1966 = ssub.s32 16, 16
          %1967 = vsyncadd %s1939, %s1966
          %s1968 = smul.addr %s31, 16
          %s1969 = scalar_lea.hbm %s5, %s1968
          %s1971 = sshll.u32 %s1941, 4
          %s1972 = int_to_ptr.vmem [resolvable:$true] %s1971
          %1974 = dma.vmem_to_hbm [thread:$0]  %s1972, 16, %s1969, %s1939
        $region56: #{tpu_custom_call.1} parent=35 // pred_fallthru
          _
        // Predicated region
        $region57: #{tpu_custom_call.1} parent=35 // pred_check
          %p1975 = pneg %p205
        $region58: #{tpu_custom_call.1} parent=35 // pred_check_branch
          %1977 = sbr.rel (%p1975) target = $region60
        $region59: #{tpu_custom_call.1} parent=35 // pred_region
          %s1979 = ssub.s32 16, 16
          %1980 = vsyncadd %s1943, %s1979
          %s1981 = smul.addr %s31, 16
          %s1982 = scalar_lea.hbm %s6, %s1981
          %s1984 = sshll.u32 %s1945, 4
          %s1985 = int_to_ptr.vmem [resolvable:$true] %s1984
          %1987 = dma.vmem_to_hbm [thread:$0]  %s1985, 16, %s1982, %s1943
        $region60: #{tpu_custom_call.1} parent=35 // pred_fallthru
          _
      $region36: #{tpu_custom_call.1} parent=5 // pred_fallthru
        _
      %p1988 = scmp.le.s32.totalorder 2, %s22
      // Predicated region
      $region61: #{tpu_custom_call.1} parent=5 // pred_check
        %p1989 = pneg %p1988
      $region62: #{tpu_custom_call.1} parent=5 // pred_check_branch
        %1991 = sbr.rel (%p1989) target = $region64
      $region63: #{tpu_custom_call.1} parent=5 // pred_region
        %s1992 = ssub.s32 %s22, 2
        // Predicated region
        $region65: #{tpu_custom_call.1} parent=63 // pred_check
          %p1993 = pneg %p159
        $region66: #{tpu_custom_call.1} parent=63 // pred_check_branch
          %1995 = sbr.rel (%p1993) target = $region68
        $region67: #{tpu_custom_call.1} parent=63 // pred_region
          %s1996 = sand.u32 %s144, 1
          %s1997 = scalar_lea.sflag [#allocation5], %s1996
          %s1998 = sand.u32 %s144, 1
          %s1999 = smul.addr %s1998, 256
          %s2000 = scalar_lea.vmem [#allocation6], %s1999
          %2001 = dma.done %s1997, 4096
        $region68: #{tpu_custom_call.1} parent=63 // pred_fallthru
          _
        // Predicated region
        $region69: #{tpu_custom_call.1} parent=63 // pred_check
          %p2002 = pneg %p185
        $region70: #{tpu_custom_call.1} parent=63 // pred_check_branch
          %2004 = sbr.rel (%p2002) target = $region72
        $region71: #{tpu_custom_call.1} parent=63 // pred_region
          %s2005 = sand.u32 %s28, 1
          %s2006 = scalar_lea.sflag [#allocation8], %s2005
          %s2007 = sand.u32 %s170, 1
          %s2008 = scalar_lea.vmem [#allocation7], %s2007
          %2009 = dma.done %s2006, 16
        $region72: #{tpu_custom_call.1} parent=63 // pred_fallthru
          _
        // Predicated region
        $region73: #{tpu_custom_call.1} parent=63 // pred_check
          %p2010 = pneg %p211
        $region74: #{tpu_custom_call.1} parent=63 // pred_check_branch
          %2012 = sbr.rel (%p2010) target = $region76
        $region75: #{tpu_custom_call.1} parent=63 // pred_region
          %s2013 = sand.u32 %s28, 1
          %s2014 = scalar_lea.sflag [#allocation8], %s2013
          %s2015 = sand.u32 %s196, 1
          %s2016 = scalar_lea.vmem [#allocation9], %s2015
          %2017 = dma.done %s2014, 16
        $region76: #{tpu_custom_call.1} parent=63 // pred_fallthru
          _
      $region64: #{tpu_custom_call.1} parent=5 // pred_fallthru
        _
    $region6: #{tpu_custom_call.1} parent=1 // loop_footer
      %s26 = sadd.s32 1, %s22
    $region7: #{tpu_custom_call.1} parent=1 // loop_footer_branch
      %21 = sbr.rel target = $region3
    $region8: #{tpu_custom_call.1} parent=1 // loop_exit
      _
    %2018 = vsyncpa [#allocation4], 1
    %s2019 = scalar_lea.sflag [#allocation4], 1
    %2020 = vsyncpa %s2019, 1
    %2021 = vsyncpa [#allocation5], 1
    %s2022 = scalar_lea.sflag [#allocation5], 1
    %2023 = vsyncpa %s2022, 1
    %2024 = vsyncpa [#allocation8], 1
    %s2025 = scalar_lea.sflag [#allocation8], 1
    %2026 = vsyncpa %s2025, 1

</llo_original>
